<compile_context>
chip_gen: v7x
topology: tpu7x:2x2x1
jax: 0.10.0
libtpu: 0.0.40
codegen_flags: <defaults>
</compile_context>

<pallas_src>
import functools
import math

import numpy as np
import jax
import jax.numpy as jnp
from jax import lax
from jax.experimental import pallas as pl
from jax.experimental.pallas import tpu as pltpu


def mhsa_kernel(x_ref, wqkv_ref, bqkv_ref, wo_ref, bo_ref, o_ref, concat_ref, *,
                num_heads, d_k, batch_block, seq_len, compute_dtype):
    """Fused MHSA for one block of `batch_block` batch elements.

    x_ref:      (batch_block*S, D)  compute_dtype  (batch fused into matmul M)
    wqkv_ref:   (D, 3*D)            compute_dtype  (q columns pre-scaled by 1/sqrt(d_k))
    bqkv_ref:   (1, 3*D)            float32        (q part pre-scaled)
    wo_ref:     (D, D)              compute_dtype
    bo_ref:     (1, D)              float32
    o_ref:      (batch_block*S, D)  float32
    concat_ref: (batch_block*S, D)  compute_dtype VMEM scratch (head-concat slab)
    """
    D = num_heads * d_k
    S = seq_len
    approx = np.dtype(compute_dtype) != np.dtype(np.float32)

    # Fused QKV projection: one (R, D) @ (D, 3D) MXU matmul, f32 accumulation,
    # f32 bias add.  R = batch_block * S, so the batch dim is folded into M.
    x = x_ref[...]
    qkv = jnp.dot(x, wqkv_ref[...], preferred_element_type=jnp.float32) + bqkv_ref[...]
    q = qkv[:, 0 * D:1 * D]                      # f32, scale already folded in
    k = qkv[:, 1 * D:2 * D]                      # f32
    v = qkv[:, 2 * D:3 * D].astype(compute_dtype)

    # Per-(batch row, head) attention with static unrolled loops (batch_block
    # and num_heads are compile-time constants).  Head outputs are written
    # straight into the VMEM concat slab -- no jnp.concatenate, no kh.T.
    # TODO(synk): optional `mask` argument of the PyTorch forward not plumbed
    # through (module is called with mask=None in training).
    # TODO(synk): for long sequences (S >~ 512) tile KV blocks flash-style
    # (online softmax accumulator) instead of materializing (S, S) scores,
    # especially on v7x where VMEM is 64 MiB.
    for b in range(batch_block):
        r_sl = slice(b * S, (b + 1) * S)
        for h in range(num_heads):
            c_sl = slice(h * d_k, (h + 1) * d_k)
            qh = q[r_sl, c_sl].astype(compute_dtype)     # (S, d_k)
            kh = k[r_sl, c_sl].astype(compute_dtype)     # (S, d_k)
            vh = v[r_sl, c_sl]                           # (S, d_k)

            # scores = qh @ kh^T by contracting d_k on both operands -- no
            # materialized transpose of kh.
            s = lax.dot_general(qh, kh, (((1,), (1,)), ((), ())),
                                preferred_element_type=jnp.float32)     # (S, S)
            s = s - jnp.max(s, axis=-1, keepdims=True)
            p = jnp.exp(s)
            l = jnp.sum(p, axis=-1, keepdims=True)                      # (S, 1)

            o = jnp.dot(p.astype(compute_dtype), vh,
                        preferred_element_type=jnp.float32)             # (S, d_k)
            # Normalize after PV: S*d_k elements instead of S*S; EUP reciprocal.
            o = o * pl.reciprocal(l, approx=approx)
            concat_ref[r_sl, c_sl] = o.astype(compute_dtype)

    # Output projection over the whole slab: one (R, D) @ (D, D) MXU matmul.
    out = jnp.dot(concat_ref[...], wo_ref[...],
                  preferred_element_type=jnp.float32) + bo_ref[...]
    o_ref[...] = out.astype(o_ref.dtype)


def _pick_batch_block(batch, seq_len, target_rows=256, max_block=8):
    """Fold as many batch elements per grid step as is sensible: amortizes the
    ~0.35us per-grid-step overhead and feeds the MXU larger M tiles."""
    tb = max(1, min(batch, max(1, target_rows // max(seq_len, 1)), max_block))
    while tb > 1 and (batch % tb != 0 or (tb * seq_len) % 8 != 0):
        tb -= 1
    if tb < batch and (tb * seq_len) % 8 != 0:
        tb = batch   # single full-extent block is always a legal BlockSpec
    return tb


def multi_head_self_attention(x, params, num_heads, *, compute_dtype=jnp.bfloat16,
                              batch_block=None):
    """x: (B, S, D) float32.  params: PyTorch-convention Linear weights
    (W: (out, in), b: (out,)) for q/k/v/out."""
    B, S, D = x.shape
    assert D % num_heads == 0
    d_k = D // num_heads
    scale = 1.0 / math.sqrt(d_k)
    f32 = jnp.float32

    if batch_block is None:
        batch_block = _pick_batch_block(B, S)
    assert B % batch_block == 0
    row_block = batch_block * S
    grid = (B // batch_block,)

    # Wrapper-side param prep: transpose to (in, out) so the kernel computes
    # x @ W; fuse Q/K/V weights into one (D, 3D) matrix; fold the 1/sqrt(d_k)
    # scale into the q weights/bias; cast MXU operands to compute_dtype
    # (2x MXU throughput + half the weight/activation DMA in bf16); keep
    # biases in f32.
    wqkv = jnp.concatenate(
        [params["wq"].T.astype(f32) * scale,
         params["wk"].T.astype(f32),
         params["wv"].T.astype(f32)], axis=1).astype(compute_dtype)      # (D, 3D)
    bqkv = jnp.concatenate(
        [params["bq"].astype(f32) * scale,
         params["bk"].astype(f32),
         params["bv"].astype(f32)]).reshape(1, 3 * D)                    # (1, 3D) f32
    wo = params["wo"].T.astype(compute_dtype)                            # (D, D)
    bo = params["bo"].astype(f32).reshape(1, D)                          # (1, D)

    # Fold batch into the matmul M dimension: (B, S, D) -> (B*S, D).
    x2d = x.reshape(B * S, D).astype(compute_dtype)

    kernel = functools.partial(
        mhsa_kernel, num_heads=num_heads, d_k=d_k, batch_block=batch_block,
        seq_len=S, compute_dtype=compute_dtype)

    c_bytes = np.dtype(compute_dtype).itemsize
    cost = pl.CostEstimate(
        flops=int(2 * B * S * D * (3 * D)                 # fused QKV projection
                  + 4 * B * num_heads * S * S * d_k       # QK^T + PV
                  + 2 * B * S * D * D),                   # output projection
        transcendentals=int(B * num_heads * S * S),       # exp in softmax
        bytes_accessed=int(B * S * D * c_bytes            # x
                           + (3 * D * D + D * D) * c_bytes  # wqkv + wo
                           + 4 * D * 4                       # biases (f32)
                           + B * S * D * 4))                 # output (f32)

    out2d = pl.pallas_call(
        kernel,
        out_shape=jax.ShapeDtypeStruct((B * S, D), jnp.float32),
        grid_spec=pltpu.PrefetchScalarGridSpec(
            num_scalar_prefetch=0,
            grid=grid,
            in_specs=[
                pl.BlockSpec((row_block, D), lambda i: (i, 0)),    # x rows
                # Constant blocks (same index every grid step).
                # TODO(synk): on v7x (64 MiB VMEM) single-buffer these via
                # pipeline_mode=pl.Buffered(1) when D is large.
                pl.BlockSpec((D, 3 * D), lambda i: (0, 0)),        # wqkv
                pl.BlockSpec((1, 3 * D), lambda i: (0, 0)),        # bqkv
                pl.BlockSpec((D, D), lambda i: (0, 0)),            # wo
                pl.BlockSpec((1, D), lambda i: (0, 0)),            # bo
            ],
            # TODO(synk): for D < 128 (demo only) the output store is lane-masked;
            # for realistic D >= 128 the last dim is already lane-dense.
            out_specs=pl.BlockSpec((row_block, D), lambda i: (i, 0)),
            scratch_shapes=[pltpu.VMEM((row_block, D), compute_dtype)],
        ),
        compiler_params=pltpu.CompilerParams(
            dimension_semantics=("parallel",)),
        cost_estimate=cost,
    )(x2d, wqkv, bqkv, wo, bo)

    return out2d.reshape(B, S, D)


def reference_mhsa(x, params, num_heads):
    """Pure-JAX reference mirroring the PyTorch forward."""
    B, S, D = x.shape
    d_k = D // num_heads

    def linear(x, w, b):  # PyTorch Linear: x @ W.T + b
        return jnp.einsum("bsd,od->bso", x, w) + b

    q = linear(x, params["wq"], params["bq"]).reshape(B, S, num_heads, d_k).transpose(0, 2, 1, 3)
    k = linear(x, params["wk"], params["bk"]).reshape(B, S, num_heads, d_k).transpose(0, 2, 1, 3)
    v = linear(x, params["wv"], params["bv"]).reshape(B, S, num_heads, d_k).transpose(0, 2, 1, 3)

    scores = jnp.einsum("bhqd,bhkd->bhqk", q, k) / math.sqrt(d_k)
    attn = jax.nn.softmax(scores, axis=-1)
    out = jnp.einsum("bhqk,bhkd->bhqd", attn, v)
    out = out.transpose(0, 2, 1, 3).reshape(B, S, D)
    return linear(out, params["wo"], params["bo"])


if __name__ == "__main__":
    B, S, D, H = 2, 8, 32, 4

    key = jax.random.PRNGKey(0)
    keys = jax.random.split(key, 9)

    # Deterministic synthetic parameters (PyTorch Linear convention: W (out,in), b (out,)).
    bound = 1.0 / math.sqrt(D)
    params = {
        "wq": jax.random.uniform(keys[0], (D, D), jnp.float32, -bound, bound),
        "bq": jax.random.uniform(keys[1], (D,), jnp.float32, -bound, bound),
        "wk": jax.random.uniform(keys[2], (D, D), jnp.float32, -bound, bound),
        "bk": jax.random.uniform(keys[3], (D,), jnp.float32, -bound, bound),
        "wv": jax.random.uniform(keys[4], (D, D), jnp.float32, -bound, bound),
        "bv": jax.random.uniform(keys[5], (D,), jnp.float32, -bound, bound),
        "wo": jax.random.uniform(keys[6], (D, D), jnp.float32, -bound, bound),
        "bo": jax.random.uniform(keys[7], (D,), jnp.float32, -bound, bound),
    }
    x = jax.random.normal(keys[8], (B, S, D), jnp.float32)

    ref = reference_mhsa(x, params, H)

    # Reference-precision path (f32 MXU operands).
    out_f32 = multi_head_self_attention(x, params, H, compute_dtype=jnp.float32)
    out_f32 = jax.block_until_ready(out_f32)
    assert out_f32.shape == (B, S, D)
    assert jnp.allclose(out_f32, ref, atol=1e-3, rtol=1e-3), "f32 path mismatch vs reference"

    # Recommended fast path: bf16 MXU operands, f32 accumulation.
    out_bf16 = multi_head_self_attention(x, params, H, compute_dtype=jnp.bfloat16)
    out_bf16 = jax.block_until_ready(out_bf16)
    assert out_bf16.shape == (B, S, D)
    assert jnp.allclose(out_bf16, ref, atol=2e-2, rtol=2e-2), "bf16 path mismatch vs reference"

    print("KERNEL_OK")
</pallas_src>

<mosaic_0001>
module attributes {stable_mosaic.version = 11 : i64} {
  func.func @mhsa_kernel(%arg0: i32, %arg1: memref<16x32xf32, #tpu.memory_space<vmem>>, %arg2: memref<32x96xf32, #tpu.memory_space<vmem>>, %arg3: memref<1x96xf32, #tpu.memory_space<vmem>>, %arg4: memref<32x32xf32, #tpu.memory_space<vmem>>, %arg5: memref<1x32xf32, #tpu.memory_space<vmem>>, %arg6: memref<16x32xf32, #tpu.memory_space<vmem>>, %arg7: memref<16x32xf32, #tpu.memory_space<vmem>>) attributes {dimension_semantics = [#tpu.dimension_semantics<parallel>], iteration_bounds = array<i64: 1>, scalar_prefetch = 0 : i64, scratch_operands = 1 : i64, tpu.core_type = #tpu.core_type<tc>, window_params = [{transform_indices = @transform_0, window_bounds = array<i64: 16, 32>}, {pipeline_mode = #tpu.pipeline_mode<synchronous>, transform_indices = @transform_1, window_bounds = array<i64: 32, 96>}, {pipeline_mode = #tpu.pipeline_mode<synchronous>, transform_indices = @transform_2, window_bounds = array<i64: 1, 96>}, {pipeline_mode = #tpu.pipeline_mode<synchronous>, transform_indices = @transform_3, window_bounds = array<i64: 32, 32>}, {pipeline_mode = #tpu.pipeline_mode<synchronous>, transform_indices = @transform_4, window_bounds = array<i64: 1, 32>}, {transform_indices = @transform_5, window_bounds = array<i64: 16, 32>}]} {
    %c0 = arith.constant 0 : index
    %c0_0 = arith.constant 0 : index
    %0 = vector.load %arg1[%c0, %c0_0] : memref<16x32xf32, #tpu.memory_space<vmem>>, vector<16x32xf32>
    %c0_1 = arith.constant 0 : index
    %c0_2 = arith.constant 0 : index
    %1 = vector.load %arg2[%c0_1, %c0_2] : memref<32x96xf32, #tpu.memory_space<vmem>>, vector<32x96xf32>
    %cst = arith.constant dense<0.000000e+00> : vector<16x96xf32>
    %2 = tpu.matmul %0, %1, %cst {dimension_numbers = #tpu.dot_dimension_numbers<[1], [0], [0], [1], [0, 0, 1, 1], [], []>} : vector<16x32xf32>, vector<32x96xf32>, vector<16x96xf32> -> vector<16x96xf32>
    %c0_3 = arith.constant 0 : index
    %c0_4 = arith.constant 0 : index
    %3 = vector.load %arg3[%c0_3, %c0_4] : memref<1x96xf32, #tpu.memory_space<vmem>>, vector<1x96xf32>
    %4 = vector.broadcast %3 : vector<1x96xf32> to vector<16x96xf32>
    %5 = arith.addf %2, %4 : vector<16x96xf32>
    %6 = vector.extract_strided_slice %5 {offsets = [0, 0], sizes = [16, 32], strides = [1, 1]} : vector<16x96xf32> to vector<16x32xf32>
    %7 = vector.extract_strided_slice %5 {offsets = [0, 32], sizes = [16, 32], strides = [1, 1]} : vector<16x96xf32> to vector<16x32xf32>
    %8 = vector.extract_strided_slice %5 {offsets = [0, 64], sizes = [16, 32], strides = [1, 1]} : vector<16x96xf32> to vector<16x32xf32>
    %9 = vector.extract_strided_slice %6 {offsets = [0, 0], sizes = [8, 8], strides = [1, 1]} : vector<16x32xf32> to vector<8x8xf32>
    %10 = vector.extract_strided_slice %7 {offsets = [0, 0], sizes = [8, 8], strides = [1, 1]} : vector<16x32xf32> to vector<8x8xf32>
    %11 = vector.extract_strided_slice %8 {offsets = [0, 0], sizes = [8, 8], strides = [1, 1]} : vector<16x32xf32> to vector<8x8xf32>
    %cst_5 = arith.constant dense<0.000000e+00> : vector<8x8xf32>
    %12 = tpu.matmul %9, %10, %cst_5 {dimension_numbers = #tpu.dot_dimension_numbers<[1], [1], [0], [0], [0, 0, 1, 0], [], []>} : vector<8x8xf32>, vector<8x8xf32>, vector<8x8xf32> -> vector<8x8xf32>
    %cst_6 = arith.constant dense<0xFF800000> : vector<8xf32>
    %13 = vector.multi_reduction <maximumf>, %12, %cst_6 [1] : vector<8x8xf32> to vector<8xf32>
    %14 = vector.shape_cast %13 : vector<8xf32> to vector<8x1xf32>
    %15 = vector.broadcast %14 : vector<8x1xf32> to vector<8x8xf32>
    %16 = arith.subf %12, %15 : vector<8x8xf32>
    %17 = math.exp %16 : vector<8x8xf32>
    %cst_7 = arith.constant dense<0.000000e+00> : vector<8xf32>
    %18 = vector.multi_reduction <add>, %17, %cst_7 [1] : vector<8x8xf32> to vector<8xf32>
    %19 = vector.shape_cast %18 : vector<8xf32> to vector<8x1xf32>
    %cst_8 = arith.constant dense<0.000000e+00> : vector<8x8xf32>
    %20 = tpu.matmul %17, %11, %cst_8 {dimension_numbers = #tpu.dot_dimension_numbers<[1], [0], [0], [1], [0, 0, 1, 1], [], []>} : vector<8x8xf32>, vector<8x8xf32>, vector<8x8xf32> -> vector<8x8xf32>
    %21 = tpu.reciprocal %19 : vector<8x1xf32> -> vector<8x1xf32>
    %22 = vector.broadcast %21 : vector<8x1xf32> to vector<8x8xf32>
    %23 = arith.mulf %20, %22 : vector<8x8xf32>
    %c0_9 = arith.constant 0 : index
    %c0_10 = arith.constant 0 : index
    %24 = vector.load %arg7[%c0_9, %c0_10] : memref<16x32xf32, #tpu.memory_space<vmem>>, vector<8x8xf32>
    tpu.vector_store %arg7[%c0_9, %c0_10], %23 {strides = array<i32>} : memref<16x32xf32, #tpu.memory_space<vmem>>, vector<8x8xf32>,
    %25 = vector.extract_strided_slice %6 {offsets = [0, 8], sizes = [8, 8], strides = [1, 1]} : vector<16x32xf32> to vector<8x8xf32>
    %26 = vector.extract_strided_slice %7 {offsets = [0, 8], sizes = [8, 8], strides = [1, 1]} : vector<16x32xf32> to vector<8x8xf32>
    %27 = vector.extract_strided_slice %8 {offsets = [0, 8], sizes = [8, 8], strides = [1, 1]} : vector<16x32xf32> to vector<8x8xf32>
    %cst_11 = arith.constant dense<0.000000e+00> : vector<8x8xf32>
    %28 = tpu.matmul %25, %26, %cst_11 {dimension_numbers = #tpu.dot_dimension_numbers<[1], [1], [0], [0], [0, 0, 1, 0], [], []>} : vector<8x8xf32>, vector<8x8xf32>, vector<8x8xf32> -> vector<8x8xf32>
    %cst_12 = arith.constant dense<0xFF800000> : vector<8xf32>
    %29 = vector.multi_reduction <maximumf>, %28, %cst_12 [1] : vector<8x8xf32> to vector<8xf32>
    %30 = vector.shape_cast %29 : vector<8xf32> to vector<8x1xf32>
    %31 = vector.broadcast %30 : vector<8x1xf32> to vector<8x8xf32>
    %32 = arith.subf %28, %31 : vector<8x8xf32>
    %33 = math.exp %32 : vector<8x8xf32>
    %cst_13 = arith.constant dense<0.000000e+00> : vector<8xf32>
    %34 = vector.multi_reduction <add>, %33, %cst_13 [1] : vector<8x8xf32> to vector<8xf32>
    %35 = vector.shape_cast %34 : vector<8xf32> to vector<8x1xf32>
    %cst_14 = arith.constant dense<0.000000e+00> : vector<8x8xf32>
    %36 = tpu.matmul %33, %27, %cst_14 {dimension_numbers = #tpu.dot_dimension_numbers<[1], [0], [0], [1], [0, 0, 1, 1], [], []>} : vector<8x8xf32>, vector<8x8xf32>, vector<8x8xf32> -> vector<8x8xf32>
    %37 = tpu.reciprocal %35 : vector<8x1xf32> -> vector<8x1xf32>
    %38 = vector.broadcast %37 : vector<8x1xf32> to vector<8x8xf32>
    %39 = arith.mulf %36, %38 : vector<8x8xf32>
    %c0_15 = arith.constant 0 : index
    %c8 = arith.constant 8 : index
    %40 = vector.load %arg7[%c0_15, %c8] : memref<16x32xf32, #tpu.memory_space<vmem>>, vector<8x8xf32>
    tpu.vector_store %arg7[%c0_15, %c8], %39 {strides = array<i32>} : memref<16x32xf32, #tpu.memory_space<vmem>>, vector<8x8xf32>,
    %41 = vector.extract_strided_slice %6 {offsets = [0, 16], sizes = [8, 8], strides = [1, 1]} : vector<16x32xf32> to vector<8x8xf32>
    %42 = vector.extract_strided_slice %7 {offsets = [0, 16], sizes = [8, 8], strides = [1, 1]} : vector<16x32xf32> to vector<8x8xf32>
    %43 = vector.extract_strided_slice %8 {offsets = [0, 16], sizes = [8, 8], strides = [1, 1]} : vector<16x32xf32> to vector<8x8xf32>
    %cst_16 = arith.constant dense<0.000000e+00> : vector<8x8xf32>
    %44 = tpu.matmul %41, %42, %cst_16 {dimension_numbers = #tpu.dot_dimension_numbers<[1], [1], [0], [0], [0, 0, 1, 0], [], []>} : vector<8x8xf32>, vector<8x8xf32>, vector<8x8xf32> -> vector<8x8xf32>
    %cst_17 = arith.constant dense<0xFF800000> : vector<8xf32>
    %45 = vector.multi_reduction <maximumf>, %44, %cst_17 [1] : vector<8x8xf32> to vector<8xf32>
    %46 = vector.shape_cast %45 : vector<8xf32> to vector<8x1xf32>
    %47 = vector.broadcast %46 : vector<8x1xf32> to vector<8x8xf32>
    %48 = arith.subf %44, %47 : vector<8x8xf32>
    %49 = math.exp %48 : vector<8x8xf32>
    %cst_18 = arith.constant dense<0.000000e+00> : vector<8xf32>
    %50 = vector.multi_reduction <add>, %49, %cst_18 [1] : vector<8x8xf32> to vector<8xf32>
    %51 = vector.shape_cast %50 : vector<8xf32> to vector<8x1xf32>
    %cst_19 = arith.constant dense<0.000000e+00> : vector<8x8xf32>
    %52 = tpu.matmul %49, %43, %cst_19 {dimension_numbers = #tpu.dot_dimension_numbers<[1], [0], [0], [1], [0, 0, 1, 1], [], []>} : vector<8x8xf32>, vector<8x8xf32>, vector<8x8xf32> -> vector<8x8xf32>
    %53 = tpu.reciprocal %51 : vector<8x1xf32> -> vector<8x1xf32>
    %54 = vector.broadcast %53 : vector<8x1xf32> to vector<8x8xf32>
    %55 = arith.mulf %52, %54 : vector<8x8xf32>
    %c0_20 = arith.constant 0 : index
    %c16 = arith.constant 16 : index
    %56 = vector.load %arg7[%c0_20, %c16] : memref<16x32xf32, #tpu.memory_space<vmem>>, vector<8x8xf32>
    tpu.vector_store %arg7[%c0_20, %c16], %55 {strides = array<i32>} : memref<16x32xf32, #tpu.memory_space<vmem>>, vector<8x8xf32>,
    %57 = vector.extract_strided_slice %6 {offsets = [0, 24], sizes = [8, 8], strides = [1, 1]} : vector<16x32xf32> to vector<8x8xf32>
    %58 = vector.extract_strided_slice %7 {offsets = [0, 24], sizes = [8, 8], strides = [1, 1]} : vector<16x32xf32> to vector<8x8xf32>
    %59 = vector.extract_strided_slice %8 {offsets = [0, 24], sizes = [8, 8], strides = [1, 1]} : vector<16x32xf32> to vector<8x8xf32>
    %cst_21 = arith.constant dense<0.000000e+00> : vector<8x8xf32>
    %60 = tpu.matmul %57, %58, %cst_21 {dimension_numbers = #tpu.dot_dimension_numbers<[1], [1], [0], [0], [0, 0, 1, 0], [], []>} : vector<8x8xf32>, vector<8x8xf32>, vector<8x8xf32> -> vector<8x8xf32>
    %cst_22 = arith.constant dense<0xFF800000> : vector<8xf32>
    %61 = vector.multi_reduction <maximumf>, %60, %cst_22 [1] : vector<8x8xf32> to vector<8xf32>
    %62 = vector.shape_cast %61 : vector<8xf32> to vector<8x1xf32>
    %63 = vector.broadcast %62 : vector<8x1xf32> to vector<8x8xf32>
    %64 = arith.subf %60, %63 : vector<8x8xf32>
    %65 = math.exp %64 : vector<8x8xf32>
    %cst_23 = arith.constant dense<0.000000e+00> : vector<8xf32>
    %66 = vector.multi_reduction <add>, %65, %cst_23 [1] : vector<8x8xf32> to vector<8xf32>
    %67 = vector.shape_cast %66 : vector<8xf32> to vector<8x1xf32>
    %cst_24 = arith.constant dense<0.000000e+00> : vector<8x8xf32>
    %68 = tpu.matmul %65, %59, %cst_24 {dimension_numbers = #tpu.dot_dimension_numbers<[1], [0], [0], [1], [0, 0, 1, 1], [], []>} : vector<8x8xf32>, vector<8x8xf32>, vector<8x8xf32> -> vector<8x8xf32>
    %69 = tpu.reciprocal %67 : vector<8x1xf32> -> vector<8x1xf32>
    %70 = vector.broadcast %69 : vector<8x1xf32> to vector<8x8xf32>
    %71 = arith.mulf %68, %70 : vector<8x8xf32>
    %c0_25 = arith.constant 0 : index
    %c24 = arith.constant 24 : index
    %72 = vector.load %arg7[%c0_25, %c24] : memref<16x32xf32, #tpu.memory_space<vmem>>, vector<8x8xf32>
    tpu.vector_store %arg7[%c0_25, %c24], %71 {strides = array<i32>} : memref<16x32xf32, #tpu.memory_space<vmem>>, vector<8x8xf32>,
    %73 = vector.extract_strided_slice %6 {offsets = [8, 0], sizes = [8, 8], strides = [1, 1]} : vector<16x32xf32> to vector<8x8xf32>
    %74 = vector.extract_strided_slice %7 {offsets = [8, 0], sizes = [8, 8], strides = [1, 1]} : vector<16x32xf32> to vector<8x8xf32>
    %75 = vector.extract_strided_slice %8 {offsets = [8, 0], sizes = [8, 8], strides = [1, 1]} : vector<16x32xf32> to vector<8x8xf32>
    %cst_26 = arith.constant dense<0.000000e+00> : vector<8x8xf32>
    %76 = tpu.matmul %73, %74, %cst_26 {dimension_numbers = #tpu.dot_dimension_numbers<[1], [1], [0], [0], [0, 0, 1, 0], [], []>} : vector<8x8xf32>, vector<8x8xf32>, vector<8x8xf32> -> vector<8x8xf32>
    %cst_27 = arith.constant dense<0xFF800000> : vector<8xf32>
    %77 = vector.multi_reduction <maximumf>, %76, %cst_27 [1] : vector<8x8xf32> to vector<8xf32>
    %78 = vector.shape_cast %77 : vector<8xf32> to vector<8x1xf32>
    %79 = vector.broadcast %78 : vector<8x1xf32> to vector<8x8xf32>
    %80 = arith.subf %76, %79 : vector<8x8xf32>
    %81 = math.exp %80 : vector<8x8xf32>
    %cst_28 = arith.constant dense<0.000000e+00> : vector<8xf32>
    %82 = vector.multi_reduction <add>, %81, %cst_28 [1] : vector<8x8xf32> to vector<8xf32>
    %83 = vector.shape_cast %82 : vector<8xf32> to vector<8x1xf32>
    %cst_29 = arith.constant dense<0.000000e+00> : vector<8x8xf32>
    %84 = tpu.matmul %81, %75, %cst_29 {dimension_numbers = #tpu.dot_dimension_numbers<[1], [0], [0], [1], [0, 0, 1, 1], [], []>} : vector<8x8xf32>, vector<8x8xf32>, vector<8x8xf32> -> vector<8x8xf32>
    %85 = tpu.reciprocal %83 : vector<8x1xf32> -> vector<8x1xf32>
    %86 = vector.broadcast %85 : vector<8x1xf32> to vector<8x8xf32>
    %87 = arith.mulf %84, %86 : vector<8x8xf32>
    %c8_30 = arith.constant 8 : index
    %c0_31 = arith.constant 0 : index
    %88 = vector.load %arg7[%c8_30, %c0_31] : memref<16x32xf32, #tpu.memory_space<vmem>>, vector<8x8xf32>
    tpu.vector_store %arg7[%c8_30, %c0_31], %87 {strides = array<i32>} : memref<16x32xf32, #tpu.memory_space<vmem>>, vector<8x8xf32>,
    %89 = vector.extract_strided_slice %6 {offsets = [8, 8], sizes = [8, 8], strides = [1, 1]} : vector<16x32xf32> to vector<8x8xf32>
    %90 = vector.extract_strided_slice %7 {offsets = [8, 8], sizes = [8, 8], strides = [1, 1]} : vector<16x32xf32> to vector<8x8xf32>
    %91 = vector.extract_strided_slice %8 {offsets = [8, 8], sizes = [8, 8], strides = [1, 1]} : vector<16x32xf32> to vector<8x8xf32>
    %cst_32 = arith.constant dense<0.000000e+00> : vector<8x8xf32>
    %92 = tpu.matmul %89, %90, %cst_32 {dimension_numbers = #tpu.dot_dimension_numbers<[1], [1], [0], [0], [0, 0, 1, 0], [], []>} : vector<8x8xf32>, vector<8x8xf32>, vector<8x8xf32> -> vector<8x8xf32>
    %cst_33 = arith.constant dense<0xFF800000> : vector<8xf32>
    %93 = vector.multi_reduction <maximumf>, %92, %cst_33 [1] : vector<8x8xf32> to vector<8xf32>
    %94 = vector.shape_cast %93 : vector<8xf32> to vector<8x1xf32>
    %95 = vector.broadcast %94 : vector<8x1xf32> to vector<8x8xf32>
    %96 = arith.subf %92, %95 : vector<8x8xf32>
    %97 = math.exp %96 : vector<8x8xf32>
    %cst_34 = arith.constant dense<0.000000e+00> : vector<8xf32>
    %98 = vector.multi_reduction <add>, %97, %cst_34 [1] : vector<8x8xf32> to vector<8xf32>
    %99 = vector.shape_cast %98 : vector<8xf32> to vector<8x1xf32>
    %cst_35 = arith.constant dense<0.000000e+00> : vector<8x8xf32>
    %100 = tpu.matmul %97, %91, %cst_35 {dimension_numbers = #tpu.dot_dimension_numbers<[1], [0], [0], [1], [0, 0, 1, 1], [], []>} : vector<8x8xf32>, vector<8x8xf32>, vector<8x8xf32> -> vector<8x8xf32>
    %101 = tpu.reciprocal %99 : vector<8x1xf32> -> vector<8x1xf32>
    %102 = vector.broadcast %101 : vector<8x1xf32> to vector<8x8xf32>
    %103 = arith.mulf %100, %102 : vector<8x8xf32>
    %c8_36 = arith.constant 8 : index
    %c8_37 = arith.constant 8 : index
    %104 = vector.load %arg7[%c8_36, %c8_37] : memref<16x32xf32, #tpu.memory_space<vmem>>, vector<8x8xf32>
    tpu.vector_store %arg7[%c8_36, %c8_37], %103 {strides = array<i32>} : memref<16x32xf32, #tpu.memory_space<vmem>>, vector<8x8xf32>,
    %105 = vector.extract_strided_slice %6 {offsets = [8, 16], sizes = [8, 8], strides = [1, 1]} : vector<16x32xf32> to vector<8x8xf32>
    %106 = vector.extract_strided_slice %7 {offsets = [8, 16], sizes = [8, 8], strides = [1, 1]} : vector<16x32xf32> to vector<8x8xf32>
    %107 = vector.extract_strided_slice %8 {offsets = [8, 16], sizes = [8, 8], strides = [1, 1]} : vector<16x32xf32> to vector<8x8xf32>
    %cst_38 = arith.constant dense<0.000000e+00> : vector<8x8xf32>
    %108 = tpu.matmul %105, %106, %cst_38 {dimension_numbers = #tpu.dot_dimension_numbers<[1], [1], [0], [0], [0, 0, 1, 0], [], []>} : vector<8x8xf32>, vector<8x8xf32>, vector<8x8xf32> -> vector<8x8xf32>
    %cst_39 = arith.constant dense<0xFF800000> : vector<8xf32>
    %109 = vector.multi_reduction <maximumf>, %108, %cst_39 [1] : vector<8x8xf32> to vector<8xf32>
    %110 = vector.shape_cast %109 : vector<8xf32> to vector<8x1xf32>
    %111 = vector.broadcast %110 : vector<8x1xf32> to vector<8x8xf32>
    %112 = arith.subf %108, %111 : vector<8x8xf32>
    %113 = math.exp %112 : vector<8x8xf32>
    %cst_40 = arith.constant dense<0.000000e+00> : vector<8xf32>
    %114 = vector.multi_reduction <add>, %113, %cst_40 [1] : vector<8x8xf32> to vector<8xf32>
    %115 = vector.shape_cast %114 : vector<8xf32> to vector<8x1xf32>
    %cst_41 = arith.constant dense<0.000000e+00> : vector<8x8xf32>
    %116 = tpu.matmul %113, %107, %cst_41 {dimension_numbers = #tpu.dot_dimension_numbers<[1], [0], [0], [1], [0, 0, 1, 1], [], []>} : vector<8x8xf32>, vector<8x8xf32>, vector<8x8xf32> -> vector<8x8xf32>
    %117 = tpu.reciprocal %115 : vector<8x1xf32> -> vector<8x1xf32>
    %118 = vector.broadcast %117 : vector<8x1xf32> to vector<8x8xf32>
    %119 = arith.mulf %116, %118 : vector<8x8xf32>
    %c8_42 = arith.constant 8 : index
    %c16_43 = arith.constant 16 : index
    %120 = vector.load %arg7[%c8_42, %c16_43] : memref<16x32xf32, #tpu.memory_space<vmem>>, vector<8x8xf32>
    tpu.vector_store %arg7[%c8_42, %c16_43], %119 {strides = array<i32>} : memref<16x32xf32, #tpu.memory_space<vmem>>, vector<8x8xf32>,
    %121 = vector.extract_strided_slice %6 {offsets = [8, 24], sizes = [8, 8], strides = [1, 1]} : vector<16x32xf32> to vector<8x8xf32>
    %122 = vector.extract_strided_slice %7 {offsets = [8, 24], sizes = [8, 8], strides = [1, 1]} : vector<16x32xf32> to vector<8x8xf32>
    %123 = vector.extract_strided_slice %8 {offsets = [8, 24], sizes = [8, 8], strides = [1, 1]} : vector<16x32xf32> to vector<8x8xf32>
    %cst_44 = arith.constant dense<0.000000e+00> : vector<8x8xf32>
    %124 = tpu.matmul %121, %122, %cst_44 {dimension_numbers = #tpu.dot_dimension_numbers<[1], [1], [0], [0], [0, 0, 1, 0], [], []>} : vector<8x8xf32>, vector<8x8xf32>, vector<8x8xf32> -> vector<8x8xf32>
    %cst_45 = arith.constant dense<0xFF800000> : vector<8xf32>
    %125 = vector.multi_reduction <maximumf>, %124, %cst_45 [1] : vector<8x8xf32> to vector<8xf32>
    %126 = vector.shape_cast %125 : vector<8xf32> to vector<8x1xf32>
    %127 = vector.broadcast %126 : vector<8x1xf32> to vector<8x8xf32>
    %128 = arith.subf %124, %127 : vector<8x8xf32>
    %129 = math.exp %128 : vector<8x8xf32>
    %cst_46 = arith.constant dense<0.000000e+00> : vector<8xf32>
    %130 = vector.multi_reduction <add>, %129, %cst_46 [1] : vector<8x8xf32> to vector<8xf32>
    %131 = vector.shape_cast %130 : vector<8xf32> to vector<8x1xf32>
    %cst_47 = arith.constant dense<0.000000e+00> : vector<8x8xf32>
    %132 = tpu.matmul %129, %123, %cst_47 {dimension_numbers = #tpu.dot_dimension_numbers<[1], [0], [0], [1], [0, 0, 1, 1], [], []>} : vector<8x8xf32>, vector<8x8xf32>, vector<8x8xf32> -> vector<8x8xf32>
    %133 = tpu.reciprocal %131 : vector<8x1xf32> -> vector<8x1xf32>
    %134 = vector.broadcast %133 : vector<8x1xf32> to vector<8x8xf32>
    %135 = arith.mulf %132, %134 : vector<8x8xf32>
    %c8_48 = arith.constant 8 : index
    %c24_49 = arith.constant 24 : index
    %136 = vector.load %arg7[%c8_48, %c24_49] : memref<16x32xf32, #tpu.memory_space<vmem>>, vector<8x8xf32>
    tpu.vector_store %arg7[%c8_48, %c24_49], %135 {strides = array<i32>} : memref<16x32xf32, #tpu.memory_space<vmem>>, vector<8x8xf32>,
    %c0_50 = arith.constant 0 : index
    %c0_51 = arith.constant 0 : index
    %137 = vector.load %arg7[%c0_50, %c0_51] : memref<16x32xf32, #tpu.memory_space<vmem>>, vector<16x32xf32>
    %c0_52 = arith.constant 0 : index
    %c0_53 = arith.constant 0 : index
    %138 = vector.load %arg4[%c0_52, %c0_53] : memref<32x32xf32, #tpu.memory_space<vmem>>, vector<32x32xf32>
    %cst_54 = arith.constant dense<0.000000e+00> : vector<16x32xf32>
    %139 = tpu.matmul %137, %138, %cst_54 {dimension_numbers = #tpu.dot_dimension_numbers<[1], [0], [0], [1], [0, 0, 1, 1], [], []>} : vector<16x32xf32>, vector<32x32xf32>, vector<16x32xf32> -> vector<16x32xf32>
    %c0_55 = arith.constant 0 : index
    %c0_56 = arith.constant 0 : index
    %140 = vector.load %arg5[%c0_55, %c0_56] : memref<1x32xf32, #tpu.memory_space<vmem>>, vector<1x32xf32>
    %141 = vector.broadcast %140 : vector<1x32xf32> to vector<16x32xf32>
    %142 = arith.addf %139, %141 : vector<16x32xf32>
    %c0_57 = arith.constant 0 : index
    %c0_58 = arith.constant 0 : index
    %143 = vector.load %arg6[%c0_57, %c0_58] : memref<16x32xf32, #tpu.memory_space<vmem>>, vector<16x32xf32>
    tpu.vector_store %arg6[%c0_57, %c0_58], %142 {strides = array<i32>} : memref<16x32xf32, #tpu.memory_space<vmem>>, vector<16x32xf32>,
    return
  }
  func.func @transform_0(%arg0: i32) -> (i32, i32) {
    %c0_i32 = arith.constant 0 : i32
    %c0_i32_0 = arith.constant 0 : i32
    return %arg0, %c0_i32 : i32, i32
  }
  func.func @transform_1(%arg0: i32) -> (i32, i32) {
    %c0_i32 = arith.constant 0 : i32
    %c0_i32_0 = arith.constant 0 : i32
    %c0_i32_1 = arith.constant 0 : i32
    return %c0_i32, %c0_i32_0 : i32, i32
  }
  func.func @transform_2(%arg0: i32) -> (i32, i32) {
    %c0_i32 = arith.constant 0 : i32
    %c0_i32_0 = arith.constant 0 : i32
    %c0_i32_1 = arith.constant 0 : i32
    return %c0_i32, %c0_i32_0 : i32, i32
  }
  func.func @transform_3(%arg0: i32) -> (i32, i32) {
    %c0_i32 = arith.constant 0 : i32
    %c0_i32_0 = arith.constant 0 : i32
    %c0_i32_1 = arith.constant 0 : i32
    return %c0_i32, %c0_i32_0 : i32, i32
  }
  func.func @transform_4(%arg0: i32) -> (i32, i32) {
    %c0_i32 = arith.constant 0 : i32
    %c0_i32_0 = arith.constant 0 : i32
    %c0_i32_1 = arith.constant 0 : i32
    return %c0_i32, %c0_i32_0 : i32, i32
  }
  func.func @transform_5(%arg0: i32) -> (i32, i32) {
    %c0_i32 = arith.constant 0 : i32
    %c0_i32_0 = arith.constant 0 : i32
    return %arg0, %c0_i32 : i32, i32
  }
}

</mosaic_0001>

<llo_original>
// kernel: tpu_custom_call.1
$region0: #{tpu_custom_call.1}
  #allocation0 [shape = 'u32[]', space=smem, size = 0x4, offset = 0x4, fixed_abs, tag = 'smem constant byte address 0x4 - core index']
  #allocation1 [shape = 'u32[144,128]{1,0:T(1,128)}', space=vmem, size = 0x12000, scoped, tag = 'internal scratch']
  #allocation2 [shape = 'f32[16,32]{1,0:T(8,128)}', space=vmem, size = 0x2000, scoped, tag = 'scratch operand']
  %s0 = inlined_call_operand.hbm [shape: f32[16,32], index: 0, kind: input, shape index: {}]
  %s1 = inlined_call_operand.hbm [shape: f32[32,96], index: 1, kind: input, shape index: {}]
  %s2 = inlined_call_operand.vmem [shape: f32[1,96], index: 2, kind: input, shape index: {}]
  %s3 = inlined_call_operand.hbm [shape: f32[32,32], index: 3, kind: input, shape index: {}]
  %s4 = inlined_call_operand.vmem [shape: f32[1,32], index: 4, kind: input, shape index: {}]
  %s5 = inlined_call_operand.hbm [shape: f32[16,32], index: 5, kind: output, shape index: {}]
  %s6 = sld [smem:[#allocation0]]
  $region42: #{tpu_custom_call.1} parent=0
    _
  %s8 = ssub.s32 1, %s6
  %s9 = scalar_select 0, %s8, %s6
  $region1: #{tpu_custom_call.1} parent=0
    #allocation3 [shape = 'u8[8192]{0}', space=vmem, size = 0x2000, scoped, tag = 'input window, operand 0, single buffered']
    #allocation4 [shape = 's32[1]{0}', space=sflag, size = 0x4, scoped, tag = 'scoped memory for tpu_custom_call.1']
    #allocation5 [shape = 's32[1]{0}', space=sflag, size = 0x4, scoped, tag = 'scoped memory for tpu_custom_call.1']
    #allocation6 [shape = 'u8[16384]{0}', space=vmem, size = 0x4000, scoped, tag = 'input window, operand 1, single buffered']
    #allocation7 [shape = 's32[1]{0}', space=sflag, size = 0x4, scoped, tag = 'scoped memory for tpu_custom_call.1']
    #allocation8 [shape = 'u8[16384]{0}', space=vmem, size = 0x4000, scoped, tag = 'input window, operand 3, single buffered']
    #allocation9 [shape = 'u8[8192]{0}', space=vmem, size = 0x2000, scoped, tag = 'output window, operand 0, single buffered']
    %10 = vsyncpa [#allocation4], 0
    %11 = vsyncpa [#allocation7], 0
    %12 = vsyncpa [#allocation5], 0
    // Predicated region
    $region2: #{tpu_custom_call.1} parent=1 // pred_check
      _
    $region3: #{tpu_custom_call.1} parent=1 // pred_check_branch
      %14 = sbr.rel (0) target = $region5
    $region4: #{tpu_custom_call.1} parent=1 // pred_region
      %s16 = ssub.s32 256, 256
      %17 = vsyncadd [#allocation4], %s16
      %s18 = sshll.u32 [#allocation3], 4
      %s19 = int_to_ptr.vmem [resolvable:$true] %s18
      %24 = dma.hbm_to_vmem [thread:$0]  %s0, 256, %s19, [#allocation4], 128, 128, 8
    $region5: #{tpu_custom_call.1} parent=1 // pred_fallthru
      _
    // Predicated region
    $region6: #{tpu_custom_call.1} parent=1 // pred_check
      _
    $region7: #{tpu_custom_call.1} parent=1 // pred_check_branch
      %26 = sbr.rel (0) target = $region9
    $region8: #{tpu_custom_call.1} parent=1 // pred_region
      %s28 = ssub.s32 512, 512
      %29 = vsyncadd [#allocation7], %s28
      %s30 = sshll.u32 [#allocation6], 4
      %s31 = int_to_ptr.vmem [resolvable:$true] %s30
      %36 = dma.hbm_to_vmem [thread:$0]  %s1, 512, %s31, [#allocation7], 128, 128, 8
    $region9: #{tpu_custom_call.1} parent=1 // pred_fallthru
      _
    // Predicated region
    $region10: #{tpu_custom_call.1} parent=1 // pred_check
      _
    $region11: #{tpu_custom_call.1} parent=1 // pred_check_branch
      %38 = sbr.rel (0) target = $region13
    $region12: #{tpu_custom_call.1} parent=1 // pred_region
      _
    $region13: #{tpu_custom_call.1} parent=1 // pred_fallthru
      _
    // Predicated region
    $region14: #{tpu_custom_call.1} parent=1 // pred_check
      _
    $region15: #{tpu_custom_call.1} parent=1 // pred_check_branch
      %40 = sbr.rel (0) target = $region17
    $region16: #{tpu_custom_call.1} parent=1 // pred_region
      %s42 = ssub.s32 512, 512
      %43 = vsyncadd [#allocation7], %s42
      %s44 = sshll.u32 [#allocation8], 4
      %s45 = int_to_ptr.vmem [resolvable:$true] %s44
      %50 = dma.hbm_to_vmem [thread:$0]  %s3, 512, %s45, [#allocation7], 128, 128, 8
    $region17: #{tpu_custom_call.1} parent=1 // pred_fallthru
      _
    // Predicated region
    $region18: #{tpu_custom_call.1} parent=1 // pred_check
      _
    $region19: #{tpu_custom_call.1} parent=1 // pred_check_branch
      %52 = sbr.rel (0) target = $region21
    $region20: #{tpu_custom_call.1} parent=1 // pred_region
      _
    $region21: #{tpu_custom_call.1} parent=1 // pred_fallthru
      _
    // Predicated region
    $region22: #{tpu_custom_call.1} parent=1 // pred_check
      _
    $region23: #{tpu_custom_call.1} parent=1 // pred_check_branch
      %54 = sbr.rel (0) target = $region25
    $region24: #{tpu_custom_call.1} parent=1 // pred_region
      %55 = dma.done [#allocation4], 256
    $region25: #{tpu_custom_call.1} parent=1 // pred_fallthru
      _
    // Predicated region
    $region26: #{tpu_custom_call.1} parent=1 // pred_check
      _
    $region27: #{tpu_custom_call.1} parent=1 // pred_check_branch
      %57 = sbr.rel (0) target = $region29
    $region28: #{tpu_custom_call.1} parent=1 // pred_region
      %58 = dma.done [#allocation7], 512
    $region29: #{tpu_custom_call.1} parent=1 // pred_fallthru
      _
    // Predicated region
    $region30: #{tpu_custom_call.1} parent=1 // pred_check
      _
    $region31: #{tpu_custom_call.1} parent=1 // pred_check_branch
      %60 = sbr.rel (0) target = $region33
    $region32: #{tpu_custom_call.1} parent=1 // pred_region
      %61 = dma.done [#allocation7], 512
    $region33: #{tpu_custom_call.1} parent=1 // pred_fallthru
      _
    %v62 = vld [vmem:[#allocation3] sm:$0xff]
    %v63 = vld [vmem:[#allocation3 + $0x8] sm:$0xff]
    %v64 = vld [vmem:[#allocation6] sm:$0xff]
    %v65 = vld [vmem:[#allocation6 + $0x8] sm:$0xff]
    %v66 = vld [vmem:[#allocation6 + $0x10] sm:$0xff]
    %v67 = vld [vmem:[#allocation6 + $0x18] sm:$0xff]
    %v68 = vld [vmem:[%s2] sm:$0x1]
    %v70 = vlaneseq
    %v71 = vshrl.u32 %v70, 7
    %v72 = vsub.s32 0, %v71
    %v73 = vrot.slane %v68, %v72
    %vm75 = vcmask 261120
    %v77 = vsel %vm75, %v62, 0
    %v80 = vsel %vm75, %v63, 0
    %82 = vmatprep.subr.mxu0 0.0
    %83 = vmatpush1.msra.mxu0 %v64
    %84 = vmatprep.subr.mxu0 0.0
    %85 = vmatpush1.msra.mxu0 %v65
    %86 = vmatprep.subr.mxu0 0.0
    %87 = vmatpush1.msra.mxu0 %v66
    %88 = vmatprep.subr.mxu0 0.0
    %89 = vmatpush1.msra.mxu0 %v67
    %90 = vmatprep.subr.mxu0 0.0
    %91 = vmatpush1.msra.mxu0 0.0
    %92 = vmatprep.subr.mxu0 0.0
    %93 = vmatpush1.msra.mxu0 0.0
    %94 = vmatprep.subr.mxu0 0.0
    %95 = vmatpush1.msra.mxu0 0.0
    %96 = vmatprep.subr.mxu0 0.0
    %97 = vmatpush1.msra.mxu0 0.0
    %98 = vmatprep.subr.mxu0 0.0
    %99 = vmatpush1.msra.mxu0 0.0
    %100 = vmatprep.subr.mxu0 0.0
    %101 = vmatpush1.msra.mxu0 0.0
    %102 = vmatprep.subr.mxu0 0.0
    %103 = vmatpush1.msra.mxu0 0.0
    %104 = vmatprep.subr.mxu0 0.0
    %105 = vmatpush1.msra.mxu0 0.0
    %106 = vmatprep.subr.mxu0 0.0
    %107 = vmatpush1.msra.mxu0 0.0
    %108 = vmatprep.subr.mxu0 0.0
    %109 = vmatpush1.msra.mxu0 0.0
    %110 = vmatprep.subr.mxu0 0.0
    %111 = vmatpush1.msra.mxu0 0.0
    %112 = vmatprep.subr.mxu0 0.0
    %113 = vmatpush1.msra.mxu0 0.0
    %114 = vmatprep.subr.mxu0 0.0
    %115 = vmatpush1.msra.mxu0 0.0
    %116 = vmatprep.subr.mxu0 0.0
    %117 = vmatpush1.msra.mxu0 0.0
    %118 = vmatprep.subr.mxu0 0.0
    %119 = vmatpush1.msra.mxu0 0.0
    %120 = vmatprep.subr.mxu0 0.0
    %121 = vmatpush1.msra.mxu0 0.0
    %122 = vmatprep.subr.mxu0 0.0
    %123 = vmatpush1.msra.mxu0 0.0
    %124 = vmatprep.subr.mxu0 0.0
    %125 = vmatpush1.msra.mxu0 0.0
    %126 = vmatprep.subr.mxu0 0.0
    %127 = vmatpush1.msra.mxu0 0.0
    %128 = vmatprep.subr.mxu0 0.0
    %129 = vmatpush1.msra.mxu0 0.0
    %130 = vmatprep.subr.mxu0 0.0
    %131 = vmatpush1.msra.mxu0 0.0
    %132 = vmatprep.subr.mxu0 0.0
    %133 = vmatpush1.msra.mxu0 0.0
    %134 = vmatprep.subr.mxu0 0.0
    %135 = vmatpush1.msra.mxu0 0.0
    %136 = vmatprep.subr.mxu0 0.0
    %137 = vmatpush1.msra.mxu0 0.0
    %138 = vmatprep.subr.mxu0 0.0
    %139 = vmatpush1.msra.mxu0 0.0
    %140 = vmatprep.subr.mxu0 0.0
    %141 = vmatpush1.msra.mxu0 0.0
    %142 = vmatprep.subr.mxu0 0.0
    %143 = vmatpush1.msra.mxu0 0.0
    %144 = vmatprep.subr.mxu0 0.0
    %145 = vmatpush1.msra.mxu0 0.0
    %146 = vmatprep.mubr.f32.mxu0 0.0
    %147 = vmatmul.mubr.f32.gmra.mrb[0].mxu0 %v77
    %v148 = vpop.f32.mrb[0].mxu0
    %v149 = vadd.f32 %v73, %v148
    %v150 = vpop.f32.mrb[0].mxu0
    %151 = vmatprep.mubr.f32.mxu0 0.0
    %152 = vmatmul.mubr.f32.gmra.mrb[0].mxu0 %v80
    %v153 = vpop.f32.mrb[0].mxu0
    %v154 = vadd.f32 %v73, %v153
    %v155 = vpop.f32.mrb[0].mxu0
    %156 = vdwg.mxu0
    %158 = vrot.lane.b32.xlu0 %v149, 96
    %v159 = vpop.permute.xlu0 %158
    %vm160 = vcmask 64512
    %v161 = vsel %vm160, %v149, 0
    %v163 = vsel %vm160, %v159, 0
    %165 = vmatprep.subr.mxu0 0.0
    %166 = vmatpush1.xpose.msra.mxu0 %v163
    %167 = vmatprep.subr.mxu0 0.0
    %168 = vmatpush1.xpose.msra.mxu0 0.0
    %169 = vmatprep.subr.mxu0 0.0
    %170 = vmatpush1.xpose.msra.mxu0 0.0
    %171 = vmatprep.subr.mxu0 0.0
    %172 = vmatpush1.xpose.msra.mxu0 0.0
    %173 = vmatprep.subr.mxu0 0.0
    %174 = vmatpush1.xpose.msra.mxu0 0.0
    %175 = vmatprep.subr.mxu0 0.0
    %176 = vmatpush1.xpose.msra.mxu0 0.0
    %177 = vmatprep.subr.mxu0 0.0
    %178 = vmatpush1.xpose.msra.mxu0 0.0
    %179 = vmatprep.subr.mxu0 0.0
    %180 = vmatpush1.xpose.msra.mxu0 0.0
    %181 = vmatprep.subr.mxu0 0.0
    %182 = vmatpush1.xpose.msra.mxu0 0.0
    %183 = vmatprep.subr.mxu0 0.0
    %184 = vmatpush1.xpose.msra.mxu0 0.0
    %185 = vmatprep.subr.mxu0 0.0
    %186 = vmatpush1.xpose.msra.mxu0 0.0
    %187 = vmatprep.subr.mxu0 0.0
    %188 = vmatpush1.xpose.msra.mxu0 0.0
    %189 = vmatprep.subr.mxu0 0.0
    %190 = vmatpush1.xpose.msra.mxu0 0.0
    %191 = vmatprep.subr.mxu0 0.0
    %192 = vmatpush1.xpose.msra.mxu0 0.0
    %193 = vmatprep.subr.mxu0 0.0
    %194 = vmatpush1.xpose.msra.mxu0 0.0
    %195 = vmatprep.subr.mxu0 0.0
    %196 = vmatpush1.xpose.msra.mxu0 0.0
    %197 = vmatprep.subr.mxu0 0.0
    %198 = vmatpush1.xpose.msra.mxu0 0.0
    %199 = vmatprep.subr.mxu0 0.0
    %200 = vmatpush1.xpose.msra.mxu0 0.0
    %201 = vmatprep.subr.mxu0 0.0
    %202 = vmatpush1.xpose.msra.mxu0 0.0
    %203 = vmatprep.subr.mxu0 0.0
    %204 = vmatpush1.xpose.msra.mxu0 0.0
    %205 = vmatprep.subr.mxu0 0.0
    %206 = vmatpush1.xpose.msra.mxu0 0.0
    %207 = vmatprep.subr.mxu0 0.0
    %208 = vmatpush1.xpose.msra.mxu0 0.0
    %209 = vmatprep.subr.mxu0 0.0
    %210 = vmatpush1.xpose.msra.mxu0 0.0
    %211 = vmatprep.subr.mxu0 0.0
    %212 = vmatpush1.xpose.msra.mxu0 0.0
    %213 = vmatprep.subr.mxu0 0.0
    %214 = vmatpush1.xpose.msra.mxu0 0.0
    %215 = vmatprep.subr.mxu0 0.0
    %216 = vmatpush1.xpose.msra.mxu0 0.0
    %217 = vmatprep.subr.mxu0 0.0
    %218 = vmatpush1.xpose.msra.mxu0 0.0
    %219 = vmatprep.subr.mxu0 0.0
    %220 = vmatpush1.xpose.msra.mxu0 0.0
    %221 = vmatprep.subr.mxu0 0.0
    %222 = vmatpush1.xpose.msra.mxu0 0.0
    %223 = vmatprep.subr.mxu0 0.0
    %224 = vmatpush1.xpose.msra.mxu0 0.0
    %225 = vmatprep.subr.mxu0 0.0
    %226 = vmatpush1.xpose.msra.mxu0 0.0
    %227 = vmatprep.subr.mxu0 0.0
    %228 = vmatpush1.xpose.msra.mxu0 0.0
    %229 = vmatprep.mubr.f32.mxu0 0.0
    %230 = vmatmul.mubr.f32.gmra.mrb[0].mxu0 %v161
    %v231 = vpop.f32.mrb[0].mxu0
    %v232 = vadd.f32 0.0, %v231
    %v233 = vpop.f32.mrb[0].mxu0
    %234 = vdwg.mxu0
    %v235 = vsel %vm160, %v232, -inf
    %236 = vmax.xlane.f32.xlu0 %v235
    %v237 = vpop.xlane.xlu0 %236
    %v238 = vsub.f32 %v232, %v237
    %v239 = vmul.f32 %v238, 1.442695
    %v240 = vpow.pop %v239
    %v241 = vsel %vm160, %v240, 0.0
    %242 = vadd.xlane.f32.xlu0 %v241
    %v243 = vpop.xlane.xlu0 %242
    %244 = vrot.lane.b32.xlu0 %v149, 64
    %v245 = vpop.permute.xlu0 %244
    %v248 = vsel %vm160, %v240, 0
    %250 = vmatprep.subr.mxu0 0.0
    %251 = vmatpush1.msra.mxu0 %v245
    %252 = vmatprep.subr.mxu0 0.0
    %253 = vmatpush1.msra.mxu0 0.0
    %254 = vmatprep.subr.mxu0 0.0
    %255 = vmatpush1.msra.mxu0 0.0
    %256 = vmatprep.subr.mxu0 0.0
    %257 = vmatpush1.msra.mxu0 0.0
    %258 = vmatprep.subr.mxu0 0.0
    %259 = vmatpush1.msra.mxu0 0.0
    %260 = vmatprep.subr.mxu0 0.0
    %261 = vmatpush1.msra.mxu0 0.0
    %262 = vmatprep.subr.mxu0 0.0
    %263 = vmatpush1.msra.mxu0 0.0
    %264 = vmatprep.subr.mxu0 0.0
    %265 = vmatpush1.msra.mxu0 0.0
    %266 = vmatprep.subr.mxu0 0.0
    %267 = vmatpush1.msra.mxu0 0.0
    %268 = vmatprep.subr.mxu0 0.0
    %269 = vmatpush1.msra.mxu0 0.0
    %270 = vmatprep.subr.mxu0 0.0
    %271 = vmatpush1.msra.mxu0 0.0
    %272 = vmatprep.subr.mxu0 0.0
    %273 = vmatpush1.msra.mxu0 0.0
    %274 = vmatprep.subr.mxu0 0.0
    %275 = vmatpush1.msra.mxu0 0.0
    %276 = vmatprep.subr.mxu0 0.0
    %277 = vmatpush1.msra.mxu0 0.0
    %278 = vmatprep.subr.mxu0 0.0
    %279 = vmatpush1.msra.mxu0 0.0
    %280 = vmatprep.subr.mxu0 0.0
    %281 = vmatpush1.msra.mxu0 0.0
    %282 = vmatprep.subr.mxu0 0.0
    %283 = vmatpush1.msra.mxu0 0.0
    %284 = vmatprep.subr.mxu0 0.0
    %285 = vmatpush1.msra.mxu0 0.0
    %286 = vmatprep.subr.mxu0 0.0
    %287 = vmatpush1.msra.mxu0 0.0
    %288 = vmatprep.subr.mxu0 0.0
    %289 = vmatpush1.msra.mxu0 0.0
    %290 = vmatprep.subr.mxu0 0.0
    %291 = vmatpush1.msra.mxu0 0.0
    %292 = vmatprep.subr.mxu0 0.0
    %293 = vmatpush1.msra.mxu0 0.0
    %294 = vmatprep.subr.mxu0 0.0
    %295 = vmatpush1.msra.mxu0 0.0
    %296 = vmatprep.subr.mxu0 0.0
    %297 = vmatpush1.msra.mxu0 0.0
    %298 = vmatprep.subr.mxu0 0.0
    %299 = vmatpush1.msra.mxu0 0.0
    %300 = vmatprep.subr.mxu0 0.0
    %301 = vmatpush1.msra.mxu0 0.0
    %302 = vmatprep.subr.mxu0 0.0
    %303 = vmatpush1.msra.mxu0 0.0
    %304 = vmatprep.subr.mxu0 0.0
    %305 = vmatpush1.msra.mxu0 0.0
    %306 = vmatprep.subr.mxu0 0.0
    %307 = vmatpush1.msra.mxu0 0.0
    %308 = vmatprep.subr.mxu0 0.0
    %309 = vmatpush1.msra.mxu0 0.0
    %310 = vmatprep.subr.mxu0 0.0
    %311 = vmatpush1.msra.mxu0 0.0
    %312 = vmatprep.subr.mxu0 0.0
    %313 = vmatpush1.msra.mxu0 0.0
    %314 = vmatprep.mubr.f32.mxu0 0.0
    %315 = vmatmul.mubr.f32.gmra.mrb[0].mxu0 %v248
    %v316 = vpop.f32.mrb[0].mxu0
    %v317 = vadd.f32 0.0, %v316
    %v318 = vpop.f32.mrb[0].mxu0
    %319 = vdwg.mxu0
    %v320 = vrcp.pop %v243
    %v321 = vmul.f32 %v317, %v320
    %322 = vst.msk [vmem:[#allocation2] sm:$0xff] %vm160, %v321
    %323 = vrot.lane.b32.xlu0 %v149, 120
    %v324 = vpop.permute.xlu0 %323
    %325 = vrot.lane.b32.xlu0 %v149, 88
    %v326 = vpop.permute.xlu0 %325
    %v327 = vsel %vm160, %v324, 0
    %v329 = vsel %vm160, %v326, 0
    %331 = vmatprep.subr.mxu0 0.0
    %332 = vmatpush1.xpose.msra.mxu0 %v329
    %333 = vmatprep.subr.mxu0 0.0
    %334 = vmatpush1.xpose.msra.mxu0 0.0
    %335 = vmatprep.subr.mxu0 0.0
    %336 = vmatpush1.xpose.msra.mxu0 0.0
    %337 = vmatprep.subr.mxu0 0.0
    %338 = vmatpush1.xpose.msra.mxu0 0.0
    %339 = vmatprep.subr.mxu0 0.0
    %340 = vmatpush1.xpose.msra.mxu0 0.0
    %341 = vmatprep.subr.mxu0 0.0
    %342 = vmatpush1.xpose.msra.mxu0 0.0
    %343 = vmatprep.subr.mxu0 0.0
    %344 = vmatpush1.xpose.msra.mxu0 0.0
    %345 = vmatprep.subr.mxu0 0.0
    %346 = vmatpush1.xpose.msra.mxu0 0.0
    %347 = vmatprep.subr.mxu0 0.0
    %348 = vmatpush1.xpose.msra.mxu0 0.0
    %349 = vmatprep.subr.mxu0 0.0
    %350 = vmatpush1.xpose.msra.mxu0 0.0
    %351 = vmatprep.subr.mxu0 0.0
    %352 = vmatpush1.xpose.msra.mxu0 0.0
    %353 = vmatprep.subr.mxu0 0.0
    %354 = vmatpush1.xpose.msra.mxu0 0.0
    %355 = vmatprep.subr.mxu0 0.0
    %356 = vmatpush1.xpose.msra.mxu0 0.0
    %357 = vmatprep.subr.mxu0 0.0
    %358 = vmatpush1.xpose.msra.mxu0 0.0
    %359 = vmatprep.subr.mxu0 0.0
    %360 = vmatpush1.xpose.msra.mxu0 0.0
    %361 = vmatprep.subr.mxu0 0.0
    %362 = vmatpush1.xpose.msra.mxu0 0.0
    %363 = vmatprep.subr.mxu0 0.0
    %364 = vmatpush1.xpose.msra.mxu0 0.0
    %365 = vmatprep.subr.mxu0 0.0
    %366 = vmatpush1.xpose.msra.mxu0 0.0
    %367 = vmatprep.subr.mxu0 0.0
    %368 = vmatpush1.xpose.msra.mxu0 0.0
    %369 = vmatprep.subr.mxu0 0.0
    %370 = vmatpush1.xpose.msra.mxu0 0.0
    %371 = vmatprep.subr.mxu0 0.0
    %372 = vmatpush1.xpose.msra.mxu0 0.0
    %373 = vmatprep.subr.mxu0 0.0
    %374 = vmatpush1.xpose.msra.mxu0 0.0
    %375 = vmatprep.subr.mxu0 0.0
    %376 = vmatpush1.xpose.msra.mxu0 0.0
    %377 = vmatprep.subr.mxu0 0.0
    %378 = vmatpush1.xpose.msra.mxu0 0.0
    %379 = vmatprep.subr.mxu0 0.0
    %380 = vmatpush1.xpose.msra.mxu0 0.0
    %381 = vmatprep.subr.mxu0 0.0
    %382 = vmatpush1.xpose.msra.mxu0 0.0
    %383 = vmatprep.subr.mxu0 0.0
    %384 = vmatpush1.xpose.msra.mxu0 0.0
    %385 = vmatprep.subr.mxu0 0.0
    %386 = vmatpush1.xpose.msra.mxu0 0.0
    %387 = vmatprep.subr.mxu0 0.0
    %388 = vmatpush1.xpose.msra.mxu0 0.0
    %389 = vmatprep.subr.mxu0 0.0
    %390 = vmatpush1.xpose.msra.mxu0 0.0
    %391 = vmatprep.subr.mxu0 0.0
    %392 = vmatpush1.xpose.msra.mxu0 0.0
    %393 = vmatprep.subr.mxu0 0.0
    %394 = vmatpush1.xpose.msra.mxu0 0.0
    %395 = vmatprep.mubr.f32.mxu0 0.0
    %396 = vmatmul.mubr.f32.gmra.mrb[0].mxu0 %v327
    %v397 = vpop.f32.mrb[0].mxu0
    %v398 = vadd.f32 0.0, %v397
    %v399 = vpop.f32.mrb[0].mxu0
    %400 = vdwg.mxu0
    %v401 = vsel %vm160, %v398, -inf
    %402 = vmax.xlane.f32.xlu0 %v401
    %v403 = vpop.xlane.xlu0 %402
    %v404 = vsub.f32 %v398, %v403
    %v405 = vmul.f32 %v404, 1.442695
    %v406 = vpow.pop %v405
    %v407 = vsel %vm160, %v406, 0.0
    %408 = vadd.xlane.f32.xlu0 %v407
    %v409 = vpop.xlane.xlu0 %408
    %410 = vrot.lane.b32.xlu0 %v149, 56
    %v411 = vpop.permute.xlu0 %410
    %v414 = vsel %vm160, %v406, 0
    %416 = vmatprep.subr.mxu0 0.0
    %417 = vmatpush1.msra.mxu0 %v411
    %418 = vmatprep.subr.mxu0 0.0
    %419 = vmatpush1.msra.mxu0 0.0
    %420 = vmatprep.subr.mxu0 0.0
    %421 = vmatpush1.msra.mxu0 0.0
    %422 = vmatprep.subr.mxu0 0.0
    %423 = vmatpush1.msra.mxu0 0.0
    %424 = vmatprep.subr.mxu0 0.0
    %425 = vmatpush1.msra.mxu0 0.0
    %426 = vmatprep.subr.mxu0 0.0
    %427 = vmatpush1.msra.mxu0 0.0
    %428 = vmatprep.subr.mxu0 0.0
    %429 = vmatpush1.msra.mxu0 0.0
    %430 = vmatprep.subr.mxu0 0.0
    %431 = vmatpush1.msra.mxu0 0.0
    %432 = vmatprep.subr.mxu0 0.0
    %433 = vmatpush1.msra.mxu0 0.0
    %434 = vmatprep.subr.mxu0 0.0
    %435 = vmatpush1.msra.mxu0 0.0
    %436 = vmatprep.subr.mxu0 0.0
    %437 = vmatpush1.msra.mxu0 0.0
    %438 = vmatprep.subr.mxu0 0.0
    %439 = vmatpush1.msra.mxu0 0.0
    %440 = vmatprep.subr.mxu0 0.0
    %441 = vmatpush1.msra.mxu0 0.0
    %442 = vmatprep.subr.mxu0 0.0
    %443 = vmatpush1.msra.mxu0 0.0
    %444 = vmatprep.subr.mxu0 0.0
    %445 = vmatpush1.msra.mxu0 0.0
    %446 = vmatprep.subr.mxu0 0.0
    %447 = vmatpush1.msra.mxu0 0.0
    %448 = vmatprep.subr.mxu0 0.0
    %449 = vmatpush1.msra.mxu0 0.0
    %450 = vmatprep.subr.mxu0 0.0
    %451 = vmatpush1.msra.mxu0 0.0
    %452 = vmatprep.subr.mxu0 0.0
    %453 = vmatpush1.msra.mxu0 0.0
    %454 = vmatprep.subr.mxu0 0.0
    %455 = vmatpush1.msra.mxu0 0.0
    %456 = vmatprep.subr.mxu0 0.0
    %457 = vmatpush1.msra.mxu0 0.0
    %458 = vmatprep.subr.mxu0 0.0
    %459 = vmatpush1.msra.mxu0 0.0
    %460 = vmatprep.subr.mxu0 0.0
    %461 = vmatpush1.msra.mxu0 0.0
    %462 = vmatprep.subr.mxu0 0.0
    %463 = vmatpush1.msra.mxu0 0.0
    %464 = vmatprep.subr.mxu0 0.0
    %465 = vmatpush1.msra.mxu0 0.0
    %466 = vmatprep.subr.mxu0 0.0
    %467 = vmatpush1.msra.mxu0 0.0
    %468 = vmatprep.subr.mxu0 0.0
    %469 = vmatpush1.msra.mxu0 0.0
    %470 = vmatprep.subr.mxu0 0.0
    %471 = vmatpush1.msra.mxu0 0.0
    %472 = vmatprep.subr.mxu0 0.0
    %473 = vmatpush1.msra.mxu0 0.0
    %474 = vmatprep.subr.mxu0 0.0
    %475 = vmatpush1.msra.mxu0 0.0
    %476 = vmatprep.subr.mxu0 0.0
    %477 = vmatpush1.msra.mxu0 0.0
    %478 = vmatprep.subr.mxu0 0.0
    %479 = vmatpush1.msra.mxu0 0.0
    %480 = vmatprep.mubr.f32.mxu0 0.0
    %481 = vmatmul.mubr.f32.gmra.mrb[0].mxu0 %v414
    %v482 = vpop.f32.mrb[0].mxu0
    %v483 = vadd.f32 0.0, %v482
    %v484 = vpop.f32.mrb[0].mxu0
    %485 = vdwg.mxu0
    %v486 = vrcp.pop %v409
    %v487 = vmul.f32 %v483, %v486
    %489 = vrot.lane.b32.xlu0 %v487, 8
    %v490 = vpop.permute.xlu0 %489
    %vm492 = vcmask 130112
    %493 = vst.msk [vmem:[#allocation2] sm:$0xff] %vm492, %v490
    %494 = vrot.lane.b32.xlu0 %v149, 112
    %v495 = vpop.permute.xlu0 %494
    %496 = vrot.lane.b32.xlu0 %v149, 80
    %v497 = vpop.permute.xlu0 %496
    %v498 = vsel %vm160, %v495, 0
    %v500 = vsel %vm160, %v497, 0
    %502 = vmatprep.subr.mxu0 0.0
    %503 = vmatpush1.xpose.msra.mxu0 %v500
    %504 = vmatprep.subr.mxu0 0.0
    %505 = vmatpush1.xpose.msra.mxu0 0.0
    %506 = vmatprep.subr.mxu0 0.0
    %507 = vmatpush1.xpose.msra.mxu0 0.0
    %508 = vmatprep.subr.mxu0 0.0
    %509 = vmatpush1.xpose.msra.mxu0 0.0
    %510 = vmatprep.subr.mxu0 0.0
    %511 = vmatpush1.xpose.msra.mxu0 0.0
    %512 = vmatprep.subr.mxu0 0.0
    %513 = vmatpush1.xpose.msra.mxu0 0.0
    %514 = vmatprep.subr.mxu0 0.0
    %515 = vmatpush1.xpose.msra.mxu0 0.0
    %516 = vmatprep.subr.mxu0 0.0
    %517 = vmatpush1.xpose.msra.mxu0 0.0
    %518 = vmatprep.subr.mxu0 0.0
    %519 = vmatpush1.xpose.msra.mxu0 0.0
    %520 = vmatprep.subr.mxu0 0.0
    %521 = vmatpush1.xpose.msra.mxu0 0.0
    %522 = vmatprep.subr.mxu0 0.0
    %523 = vmatpush1.xpose.msra.mxu0 0.0
    %524 = vmatprep.subr.mxu0 0.0
    %525 = vmatpush1.xpose.msra.mxu0 0.0
    %526 = vmatprep.subr.mxu0 0.0
    %527 = vmatpush1.xpose.msra.mxu0 0.0
    %528 = vmatprep.subr.mxu0 0.0
    %529 = vmatpush1.xpose.msra.mxu0 0.0
    %530 = vmatprep.subr.mxu0 0.0
    %531 = vmatpush1.xpose.msra.mxu0 0.0
    %532 = vmatprep.subr.mxu0 0.0
    %533 = vmatpush1.xpose.msra.mxu0 0.0
    %534 = vmatprep.subr.mxu0 0.0
    %535 = vmatpush1.xpose.msra.mxu0 0.0
    %536 = vmatprep.subr.mxu0 0.0
    %537 = vmatpush1.xpose.msra.mxu0 0.0
    %538 = vmatprep.subr.mxu0 0.0
    %539 = vmatpush1.xpose.msra.mxu0 0.0
    %540 = vmatprep.subr.mxu0 0.0
    %541 = vmatpush1.xpose.msra.mxu0 0.0
    %542 = vmatprep.subr.mxu0 0.0
    %543 = vmatpush1.xpose.msra.mxu0 0.0
    %544 = vmatprep.subr.mxu0 0.0
    %545 = vmatpush1.xpose.msra.mxu0 0.0
    %546 = vmatprep.subr.mxu0 0.0
    %547 = vmatpush1.xpose.msra.mxu0 0.0
    %548 = vmatprep.subr.mxu0 0.0
    %549 = vmatpush1.xpose.msra.mxu0 0.0
    %550 = vmatprep.subr.mxu0 0.0
    %551 = vmatpush1.xpose.msra.mxu0 0.0
    %552 = vmatprep.subr.mxu0 0.0
    %553 = vmatpush1.xpose.msra.mxu0 0.0
    %554 = vmatprep.subr.mxu0 0.0
    %555 = vmatpush1.xpose.msra.mxu0 0.0
    %556 = vmatprep.subr.mxu0 0.0
    %557 = vmatpush1.xpose.msra.mxu0 0.0
    %558 = vmatprep.subr.mxu0 0.0
    %559 = vmatpush1.xpose.msra.mxu0 0.0
    %560 = vmatprep.subr.mxu0 0.0
    %561 = vmatpush1.xpose.msra.mxu0 0.0
    %562 = vmatprep.subr.mxu0 0.0
    %563 = vmatpush1.xpose.msra.mxu0 0.0
    %564 = vmatprep.subr.mxu0 0.0
    %565 = vmatpush1.xpose.msra.mxu0 0.0
    %566 = vmatprep.mubr.f32.mxu0 0.0
    %567 = vmatmul.mubr.f32.gmra.mrb[0].mxu0 %v498
    %v568 = vpop.f32.mrb[0].mxu0
    %v569 = vadd.f32 0.0, %v568
    %v570 = vpop.f32.mrb[0].mxu0
    %571 = vdwg.mxu0
    %v572 = vsel %vm160, %v569, -inf
    %573 = vmax.xlane.f32.xlu0 %v572
    %v574 = vpop.xlane.xlu0 %573
    %v575 = vsub.f32 %v569, %v574
    %v576 = vmul.f32 %v575, 1.442695
    %v577 = vpow.pop %v576
    %v578 = vsel %vm160, %v577, 0.0
    %579 = vadd.xlane.f32.xlu0 %v578
    %v580 = vpop.xlane.xlu0 %579
    %581 = vrot.lane.b32.xlu0 %v149, 48
    %v582 = vpop.permute.xlu0 %581
    %v585 = vsel %vm160, %v577, 0
    %587 = vmatprep.subr.mxu0 0.0
    %588 = vmatpush1.msra.mxu0 %v582
    %589 = vmatprep.subr.mxu0 0.0
    %590 = vmatpush1.msra.mxu0 0.0
    %591 = vmatprep.subr.mxu0 0.0
    %592 = vmatpush1.msra.mxu0 0.0
    %593 = vmatprep.subr.mxu0 0.0
    %594 = vmatpush1.msra.mxu0 0.0
    %595 = vmatprep.subr.mxu0 0.0
    %596 = vmatpush1.msra.mxu0 0.0
    %597 = vmatprep.subr.mxu0 0.0
    %598 = vmatpush1.msra.mxu0 0.0
    %599 = vmatprep.subr.mxu0 0.0
    %600 = vmatpush1.msra.mxu0 0.0
    %601 = vmatprep.subr.mxu0 0.0
    %602 = vmatpush1.msra.mxu0 0.0
    %603 = vmatprep.subr.mxu0 0.0
    %604 = vmatpush1.msra.mxu0 0.0
    %605 = vmatprep.subr.mxu0 0.0
    %606 = vmatpush1.msra.mxu0 0.0
    %607 = vmatprep.subr.mxu0 0.0
    %608 = vmatpush1.msra.mxu0 0.0
    %609 = vmatprep.subr.mxu0 0.0
    %610 = vmatpush1.msra.mxu0 0.0
    %611 = vmatprep.subr.mxu0 0.0
    %612 = vmatpush1.msra.mxu0 0.0
    %613 = vmatprep.subr.mxu0 0.0
    %614 = vmatpush1.msra.mxu0 0.0
    %615 = vmatprep.subr.mxu0 0.0
    %616 = vmatpush1.msra.mxu0 0.0
    %617 = vmatprep.subr.mxu0 0.0
    %618 = vmatpush1.msra.mxu0 0.0
    %619 = vmatprep.subr.mxu0 0.0
    %620 = vmatpush1.msra.mxu0 0.0
    %621 = vmatprep.subr.mxu0 0.0
    %622 = vmatpush1.msra.mxu0 0.0
    %623 = vmatprep.subr.mxu0 0.0
    %624 = vmatpush1.msra.mxu0 0.0
    %625 = vmatprep.subr.mxu0 0.0
    %626 = vmatpush1.msra.mxu0 0.0
    %627 = vmatprep.subr.mxu0 0.0
    %628 = vmatpush1.msra.mxu0 0.0
    %629 = vmatprep.subr.mxu0 0.0
    %630 = vmatpush1.msra.mxu0 0.0
    %631 = vmatprep.subr.mxu0 0.0
    %632 = vmatpush1.msra.mxu0 0.0
    %633 = vmatprep.subr.mxu0 0.0
    %634 = vmatpush1.msra.mxu0 0.0
    %635 = vmatprep.subr.mxu0 0.0
    %636 = vmatpush1.msra.mxu0 0.0
    %637 = vmatprep.subr.mxu0 0.0
    %638 = vmatpush1.msra.mxu0 0.0
    %639 = vmatprep.subr.mxu0 0.0
    %640 = vmatpush1.msra.mxu0 0.0
    %641 = vmatprep.subr.mxu0 0.0
    %642 = vmatpush1.msra.mxu0 0.0
    %643 = vmatprep.subr.mxu0 0.0
    %644 = vmatpush1.msra.mxu0 0.0
    %645 = vmatprep.subr.mxu0 0.0
    %646 = vmatpush1.msra.mxu0 0.0
    %647 = vmatprep.subr.mxu0 0.0
    %648 = vmatpush1.msra.mxu0 0.0
    %649 = vmatprep.subr.mxu0 0.0
    %650 = vmatpush1.msra.mxu0 0.0
    %651 = vmatprep.mubr.f32.mxu0 0.0
    %652 = vmatmul.mubr.f32.gmra.mrb[0].mxu0 %v585
    %v653 = vpop.f32.mrb[0].mxu0
    %v654 = vadd.f32 0.0, %v653
    %v655 = vpop.f32.mrb[0].mxu0
    %656 = vdwg.mxu0
    %v657 = vrcp.pop %v580
    %v658 = vmul.f32 %v654, %v657
    %660 = vrot.lane.b32.xlu0 %v658, 16
    %v661 = vpop.permute.xlu0 %660
    %vm663 = vcmask 195712
    %664 = vst.msk [vmem:[#allocation2] sm:$0xff] %vm663, %v661
    %665 = vrot.lane.b32.xlu0 %v149, 104
    %v666 = vpop.permute.xlu0 %665
    %667 = vrot.lane.b32.xlu0 %v149, 72
    %v668 = vpop.permute.xlu0 %667
    %v669 = vsel %vm160, %v666, 0
    %v671 = vsel %vm160, %v668, 0
    %673 = vmatprep.subr.mxu0 0.0
    %674 = vmatpush1.xpose.msra.mxu0 %v671
    %675 = vmatprep.subr.mxu0 0.0
    %676 = vmatpush1.xpose.msra.mxu0 0.0
    %677 = vmatprep.subr.mxu0 0.0
    %678 = vmatpush1.xpose.msra.mxu0 0.0
    %679 = vmatprep.subr.mxu0 0.0
    %680 = vmatpush1.xpose.msra.mxu0 0.0
    %681 = vmatprep.subr.mxu0 0.0
    %682 = vmatpush1.xpose.msra.mxu0 0.0
    %683 = vmatprep.subr.mxu0 0.0
    %684 = vmatpush1.xpose.msra.mxu0 0.0
    %685 = vmatprep.subr.mxu0 0.0
    %686 = vmatpush1.xpose.msra.mxu0 0.0
    %687 = vmatprep.subr.mxu0 0.0
    %688 = vmatpush1.xpose.msra.mxu0 0.0
    %689 = vmatprep.subr.mxu0 0.0
    %690 = vmatpush1.xpose.msra.mxu0 0.0
    %691 = vmatprep.subr.mxu0 0.0
    %692 = vmatpush1.xpose.msra.mxu0 0.0
    %693 = vmatprep.subr.mxu0 0.0
    %694 = vmatpush1.xpose.msra.mxu0 0.0
    %695 = vmatprep.subr.mxu0 0.0
    %696 = vmatpush1.xpose.msra.mxu0 0.0
    %697 = vmatprep.subr.mxu0 0.0
    %698 = vmatpush1.xpose.msra.mxu0 0.0
    %699 = vmatprep.subr.mxu0 0.0
    %700 = vmatpush1.xpose.msra.mxu0 0.0
    %701 = vmatprep.subr.mxu0 0.0
    %702 = vmatpush1.xpose.msra.mxu0 0.0
    %703 = vmatprep.subr.mxu0 0.0
    %704 = vmatpush1.xpose.msra.mxu0 0.0
    %705 = vmatprep.subr.mxu0 0.0
    %706 = vmatpush1.xpose.msra.mxu0 0.0
    %707 = vmatprep.subr.mxu0 0.0
    %708 = vmatpush1.xpose.msra.mxu0 0.0
    %709 = vmatprep.subr.mxu0 0.0
    %710 = vmatpush1.xpose.msra.mxu0 0.0
    %711 = vmatprep.subr.mxu0 0.0
    %712 = vmatpush1.xpose.msra.mxu0 0.0
    %713 = vmatprep.subr.mxu0 0.0
    %714 = vmatpush1.xpose.msra.mxu0 0.0
    %715 = vmatprep.subr.mxu0 0.0
    %716 = vmatpush1.xpose.msra.mxu0 0.0
    %717 = vmatprep.subr.mxu0 0.0
    %718 = vmatpush1.xpose.msra.mxu0 0.0
    %719 = vmatprep.subr.mxu0 0.0
    %720 = vmatpush1.xpose.msra.mxu0 0.0
    %721 = vmatprep.subr.mxu0 0.0
    %722 = vmatpush1.xpose.msra.mxu0 0.0
    %723 = vmatprep.subr.mxu0 0.0
    %724 = vmatpush1.xpose.msra.mxu0 0.0
    %725 = vmatprep.subr.mxu0 0.0
    %726 = vmatpush1.xpose.msra.mxu0 0.0
    %727 = vmatprep.subr.mxu0 0.0
    %728 = vmatpush1.xpose.msra.mxu0 0.0
    %729 = vmatprep.subr.mxu0 0.0
    %730 = vmatpush1.xpose.msra.mxu0 0.0
    %731 = vmatprep.subr.mxu0 0.0
    %732 = vmatpush1.xpose.msra.mxu0 0.0
    %733 = vmatprep.subr.mxu0 0.0
    %734 = vmatpush1.xpose.msra.mxu0 0.0
    %735 = vmatprep.subr.mxu0 0.0
    %736 = vmatpush1.xpose.msra.mxu0 0.0
    %737 = vmatprep.mubr.f32.mxu0 0.0
    %738 = vmatmul.mubr.f32.gmra.mrb[0].mxu0 %v669
    %v739 = vpop.f32.mrb[0].mxu0
    %v740 = vadd.f32 0.0, %v739
    %v741 = vpop.f32.mrb[0].mxu0
    %742 = vdwg.mxu0
    %v743 = vsel %vm160, %v740, -inf
    %744 = vmax.xlane.f32.xlu0 %v743
    %v745 = vpop.xlane.xlu0 %744
    %v746 = vsub.f32 %v740, %v745
    %v747 = vmul.f32 %v746, 1.442695
    %v748 = vpow.pop %v747
    %v749 = vsel %vm160, %v748, 0.0
    %750 = vadd.xlane.f32.xlu0 %v749
    %v751 = vpop.xlane.xlu0 %750
    %752 = vrot.lane.b32.xlu0 %v149, 40
    %v753 = vpop.permute.xlu0 %752
    %v756 = vsel %vm160, %v748, 0
    %758 = vmatprep.subr.mxu0 0.0
    %759 = vmatpush1.msra.mxu0 %v753
    %760 = vmatprep.subr.mxu0 0.0
    %761 = vmatpush1.msra.mxu0 0.0
    %762 = vmatprep.subr.mxu0 0.0
    %763 = vmatpush1.msra.mxu0 0.0
    %764 = vmatprep.subr.mxu0 0.0
    %765 = vmatpush1.msra.mxu0 0.0
    %766 = vmatprep.subr.mxu0 0.0
    %767 = vmatpush1.msra.mxu0 0.0
    %768 = vmatprep.subr.mxu0 0.0
    %769 = vmatpush1.msra.mxu0 0.0
    %770 = vmatprep.subr.mxu0 0.0
    %771 = vmatpush1.msra.mxu0 0.0
    %772 = vmatprep.subr.mxu0 0.0
    %773 = vmatpush1.msra.mxu0 0.0
    %774 = vmatprep.subr.mxu0 0.0
    %775 = vmatpush1.msra.mxu0 0.0
    %776 = vmatprep.subr.mxu0 0.0
    %777 = vmatpush1.msra.mxu0 0.0
    %778 = vmatprep.subr.mxu0 0.0
    %779 = vmatpush1.msra.mxu0 0.0
    %780 = vmatprep.subr.mxu0 0.0
    %781 = vmatpush1.msra.mxu0 0.0
    %782 = vmatprep.subr.mxu0 0.0
    %783 = vmatpush1.msra.mxu0 0.0
    %784 = vmatprep.subr.mxu0 0.0
    %785 = vmatpush1.msra.mxu0 0.0
    %786 = vmatprep.subr.mxu0 0.0
    %787 = vmatpush1.msra.mxu0 0.0
    %788 = vmatprep.subr.mxu0 0.0
    %789 = vmatpush1.msra.mxu0 0.0
    %790 = vmatprep.subr.mxu0 0.0
    %791 = vmatpush1.msra.mxu0 0.0
    %792 = vmatprep.subr.mxu0 0.0
    %793 = vmatpush1.msra.mxu0 0.0
    %794 = vmatprep.subr.mxu0 0.0
    %795 = vmatpush1.msra.mxu0 0.0
    %796 = vmatprep.subr.mxu0 0.0
    %797 = vmatpush1.msra.mxu0 0.0
    %798 = vmatprep.subr.mxu0 0.0
    %799 = vmatpush1.msra.mxu0 0.0
    %800 = vmatprep.subr.mxu0 0.0
    %801 = vmatpush1.msra.mxu0 0.0
    %802 = vmatprep.subr.mxu0 0.0
    %803 = vmatpush1.msra.mxu0 0.0
    %804 = vmatprep.subr.mxu0 0.0
    %805 = vmatpush1.msra.mxu0 0.0
    %806 = vmatprep.subr.mxu0 0.0
    %807 = vmatpush1.msra.mxu0 0.0
    %808 = vmatprep.subr.mxu0 0.0
    %809 = vmatpush1.msra.mxu0 0.0
    %810 = vmatprep.subr.mxu0 0.0
    %811 = vmatpush1.msra.mxu0 0.0
    %812 = vmatprep.subr.mxu0 0.0
    %813 = vmatpush1.msra.mxu0 0.0
    %814 = vmatprep.subr.mxu0 0.0
    %815 = vmatpush1.msra.mxu0 0.0
    %816 = vmatprep.subr.mxu0 0.0
    %817 = vmatpush1.msra.mxu0 0.0
    %818 = vmatprep.subr.mxu0 0.0
    %819 = vmatpush1.msra.mxu0 0.0
    %820 = vmatprep.subr.mxu0 0.0
    %821 = vmatpush1.msra.mxu0 0.0
    %822 = vmatprep.mubr.f32.mxu0 0.0
    %823 = vmatmul.mubr.f32.gmra.mrb[0].mxu0 %v756
    %v824 = vpop.f32.mrb[0].mxu0
    %v825 = vadd.f32 0.0, %v824
    %v826 = vpop.f32.mrb[0].mxu0
    %827 = vdwg.mxu0
    %v828 = vrcp.pop %v751
    %v829 = vmul.f32 %v825, %v828
    %831 = vrot.lane.b32.xlu0 %v829, 24
    %v832 = vpop.permute.xlu0 %831
    %vm834 = vcmask 261312
    %835 = vst.msk [vmem:[#allocation2] sm:$0xff] %vm834, %v832
    %837 = vrot.lane.b32.xlu0 %v154, 96
    %v838 = vpop.permute.xlu0 %837
    %v839 = vsel %vm160, %v154, 0
    %v841 = vsel %vm160, %v838, 0
    %843 = vmatprep.subr.mxu0 0.0
    %844 = vmatpush1.xpose.msra.mxu0 %v841
    %845 = vmatprep.subr.mxu0 0.0
    %846 = vmatpush1.xpose.msra.mxu0 0.0
    %847 = vmatprep.subr.mxu0 0.0
    %848 = vmatpush1.xpose.msra.mxu0 0.0
    %849 = vmatprep.subr.mxu0 0.0
    %850 = vmatpush1.xpose.msra.mxu0 0.0
    %851 = vmatprep.subr.mxu0 0.0
    %852 = vmatpush1.xpose.msra.mxu0 0.0
    %853 = vmatprep.subr.mxu0 0.0
    %854 = vmatpush1.xpose.msra.mxu0 0.0
    %855 = vmatprep.subr.mxu0 0.0
    %856 = vmatpush1.xpose.msra.mxu0 0.0
    %857 = vmatprep.subr.mxu0 0.0
    %858 = vmatpush1.xpose.msra.mxu0 0.0
    %859 = vmatprep.subr.mxu0 0.0
    %860 = vmatpush1.xpose.msra.mxu0 0.0
    %861 = vmatprep.subr.mxu0 0.0
    %862 = vmatpush1.xpose.msra.mxu0 0.0
    %863 = vmatprep.subr.mxu0 0.0
    %864 = vmatpush1.xpose.msra.mxu0 0.0
    %865 = vmatprep.subr.mxu0 0.0
    %866 = vmatpush1.xpose.msra.mxu0 0.0
    %867 = vmatprep.subr.mxu0 0.0
    %868 = vmatpush1.xpose.msra.mxu0 0.0
    %869 = vmatprep.subr.mxu0 0.0
    %870 = vmatpush1.xpose.msra.mxu0 0.0
    %871 = vmatprep.subr.mxu0 0.0
    %872 = vmatpush1.xpose.msra.mxu0 0.0
    %873 = vmatprep.subr.mxu0 0.0
    %874 = vmatpush1.xpose.msra.mxu0 0.0
    %875 = vmatprep.subr.mxu0 0.0
    %876 = vmatpush1.xpose.msra.mxu0 0.0
    %877 = vmatprep.subr.mxu0 0.0
    %878 = vmatpush1.xpose.msra.mxu0 0.0
    %879 = vmatprep.subr.mxu0 0.0
    %880 = vmatpush1.xpose.msra.mxu0 0.0
    %881 = vmatprep.subr.mxu0 0.0
    %882 = vmatpush1.xpose.msra.mxu0 0.0
    %883 = vmatprep.subr.mxu0 0.0
    %884 = vmatpush1.xpose.msra.mxu0 0.0
    %885 = vmatprep.subr.mxu0 0.0
    %886 = vmatpush1.xpose.msra.mxu0 0.0
    %887 = vmatprep.subr.mxu0 0.0
    %888 = vmatpush1.xpose.msra.mxu0 0.0
    %889 = vmatprep.subr.mxu0 0.0
    %890 = vmatpush1.xpose.msra.mxu0 0.0
    %891 = vmatprep.subr.mxu0 0.0
    %892 = vmatpush1.xpose.msra.mxu0 0.0
    %893 = vmatprep.subr.mxu0 0.0
    %894 = vmatpush1.xpose.msra.mxu0 0.0
    %895 = vmatprep.subr.mxu0 0.0
    %896 = vmatpush1.xpose.msra.mxu0 0.0
    %897 = vmatprep.subr.mxu0 0.0
    %898 = vmatpush1.xpose.msra.mxu0 0.0
    %899 = vmatprep.subr.mxu0 0.0
    %900 = vmatpush1.xpose.msra.mxu0 0.0
    %901 = vmatprep.subr.mxu0 0.0
    %902 = vmatpush1.xpose.msra.mxu0 0.0
    %903 = vmatprep.subr.mxu0 0.0
    %904 = vmatpush1.xpose.msra.mxu0 0.0
    %905 = vmatprep.subr.mxu0 0.0
    %906 = vmatpush1.xpose.msra.mxu0 0.0
    %907 = vmatprep.mubr.f32.mxu0 0.0
    %908 = vmatmul.mubr.f32.gmra.mrb[0].mxu0 %v839
    %v909 = vpop.f32.mrb[0].mxu0
    %v910 = vadd.f32 0.0, %v909
    %v911 = vpop.f32.mrb[0].mxu0
    %912 = vdwg.mxu0
    %v913 = vsel %vm160, %v910, -inf
    %914 = vmax.xlane.f32.xlu0 %v913
    %v915 = vpop.xlane.xlu0 %914
    %v916 = vsub.f32 %v910, %v915
    %v917 = vmul.f32 %v916, 1.442695
    %v918 = vpow.pop %v917
    %v919 = vsel %vm160, %v918, 0.0
    %920 = vadd.xlane.f32.xlu0 %v919
    %v921 = vpop.xlane.xlu0 %920
    %922 = vrot.lane.b32.xlu0 %v154, 64
    %v923 = vpop.permute.xlu0 %922
    %v926 = vsel %vm160, %v918, 0
    %928 = vmatprep.subr.mxu0 0.0
    %929 = vmatpush1.msra.mxu0 %v923
    %930 = vmatprep.subr.mxu0 0.0
    %931 = vmatpush1.msra.mxu0 0.0
    %932 = vmatprep.subr.mxu0 0.0
    %933 = vmatpush1.msra.mxu0 0.0
    %934 = vmatprep.subr.mxu0 0.0
    %935 = vmatpush1.msra.mxu0 0.0
    %936 = vmatprep.subr.mxu0 0.0
    %937 = vmatpush1.msra.mxu0 0.0
    %938 = vmatprep.subr.mxu0 0.0
    %939 = vmatpush1.msra.mxu0 0.0
    %940 = vmatprep.subr.mxu0 0.0
    %941 = vmatpush1.msra.mxu0 0.0
    %942 = vmatprep.subr.mxu0 0.0
    %943 = vmatpush1.msra.mxu0 0.0
    %944 = vmatprep.subr.mxu0 0.0
    %945 = vmatpush1.msra.mxu0 0.0
    %946 = vmatprep.subr.mxu0 0.0
    %947 = vmatpush1.msra.mxu0 0.0
    %948 = vmatprep.subr.mxu0 0.0
    %949 = vmatpush1.msra.mxu0 0.0
    %950 = vmatprep.subr.mxu0 0.0
    %951 = vmatpush1.msra.mxu0 0.0
    %952 = vmatprep.subr.mxu0 0.0
    %953 = vmatpush1.msra.mxu0 0.0
    %954 = vmatprep.subr.mxu0 0.0
    %955 = vmatpush1.msra.mxu0 0.0
    %956 = vmatprep.subr.mxu0 0.0
    %957 = vmatpush1.msra.mxu0 0.0
    %958 = vmatprep.subr.mxu0 0.0
    %959 = vmatpush1.msra.mxu0 0.0
    %960 = vmatprep.subr.mxu0 0.0
    %961 = vmatpush1.msra.mxu0 0.0
    %962 = vmatprep.subr.mxu0 0.0
    %963 = vmatpush1.msra.mxu0 0.0
    %964 = vmatprep.subr.mxu0 0.0
    %965 = vmatpush1.msra.mxu0 0.0
    %966 = vmatprep.subr.mxu0 0.0
    %967 = vmatpush1.msra.mxu0 0.0
    %968 = vmatprep.subr.mxu0 0.0
    %969 = vmatpush1.msra.mxu0 0.0
    %970 = vmatprep.subr.mxu0 0.0
    %971 = vmatpush1.msra.mxu0 0.0
    %972 = vmatprep.subr.mxu0 0.0
    %973 = vmatpush1.msra.mxu0 0.0
    %974 = vmatprep.subr.mxu0 0.0
    %975 = vmatpush1.msra.mxu0 0.0
    %976 = vmatprep.subr.mxu0 0.0
    %977 = vmatpush1.msra.mxu0 0.0
    %978 = vmatprep.subr.mxu0 0.0
    %979 = vmatpush1.msra.mxu0 0.0
    %980 = vmatprep.subr.mxu0 0.0
    %981 = vmatpush1.msra.mxu0 0.0
    %982 = vmatprep.subr.mxu0 0.0
    %983 = vmatpush1.msra.mxu0 0.0
    %984 = vmatprep.subr.mxu0 0.0
    %985 = vmatpush1.msra.mxu0 0.0
    %986 = vmatprep.subr.mxu0 0.0
    %987 = vmatpush1.msra.mxu0 0.0
    %988 = vmatprep.subr.mxu0 0.0
    %989 = vmatpush1.msra.mxu0 0.0
    %990 = vmatprep.subr.mxu0 0.0
    %991 = vmatpush1.msra.mxu0 0.0
    %992 = vmatprep.mubr.f32.mxu0 0.0
    %993 = vmatmul.mubr.f32.gmra.mrb[0].mxu0 %v926
    %v994 = vpop.f32.mrb[0].mxu0
    %v995 = vadd.f32 0.0, %v994
    %v996 = vpop.f32.mrb[0].mxu0
    %997 = vdwg.mxu0
    %v998 = vrcp.pop %v921
    %v999 = vmul.f32 %v995, %v998
    %1000 = vst.msk [vmem:[#allocation2 + $0x8] sm:$0xff] %vm160, %v999
    %1001 = vrot.lane.b32.xlu0 %v154, 120
    %v1002 = vpop.permute.xlu0 %1001
    %1003 = vrot.lane.b32.xlu0 %v154, 88
    %v1004 = vpop.permute.xlu0 %1003
    %v1005 = vsel %vm160, %v1002, 0
    %v1007 = vsel %vm160, %v1004, 0
    %1009 = vmatprep.subr.mxu0 0.0
    %1010 = vmatpush1.xpose.msra.mxu0 %v1007
    %1011 = vmatprep.subr.mxu0 0.0
    %1012 = vmatpush1.xpose.msra.mxu0 0.0
    %1013 = vmatprep.subr.mxu0 0.0
    %1014 = vmatpush1.xpose.msra.mxu0 0.0
    %1015 = vmatprep.subr.mxu0 0.0
    %1016 = vmatpush1.xpose.msra.mxu0 0.0
    %1017 = vmatprep.subr.mxu0 0.0
    %1018 = vmatpush1.xpose.msra.mxu0 0.0
    %1019 = vmatprep.subr.mxu0 0.0
    %1020 = vmatpush1.xpose.msra.mxu0 0.0
    %1021 = vmatprep.subr.mxu0 0.0
    %1022 = vmatpush1.xpose.msra.mxu0 0.0
    %1023 = vmatprep.subr.mxu0 0.0
    %1024 = vmatpush1.xpose.msra.mxu0 0.0
    %1025 = vmatprep.subr.mxu0 0.0
    %1026 = vmatpush1.xpose.msra.mxu0 0.0
    %1027 = vmatprep.subr.mxu0 0.0
    %1028 = vmatpush1.xpose.msra.mxu0 0.0
    %1029 = vmatprep.subr.mxu0 0.0
    %1030 = vmatpush1.xpose.msra.mxu0 0.0
    %1031 = vmatprep.subr.mxu0 0.0
    %1032 = vmatpush1.xpose.msra.mxu0 0.0
    %1033 = vmatprep.subr.mxu0 0.0
    %1034 = vmatpush1.xpose.msra.mxu0 0.0
    %1035 = vmatprep.subr.mxu0 0.0
    %1036 = vmatpush1.xpose.msra.mxu0 0.0
    %1037 = vmatprep.subr.mxu0 0.0
    %1038 = vmatpush1.xpose.msra.mxu0 0.0
    %1039 = vmatprep.subr.mxu0 0.0
    %1040 = vmatpush1.xpose.msra.mxu0 0.0
    %1041 = vmatprep.subr.mxu0 0.0
    %1042 = vmatpush1.xpose.msra.mxu0 0.0
    %1043 = vmatprep.subr.mxu0 0.0
    %1044 = vmatpush1.xpose.msra.mxu0 0.0
    %1045 = vmatprep.subr.mxu0 0.0
    %1046 = vmatpush1.xpose.msra.mxu0 0.0
    %1047 = vmatprep.subr.mxu0 0.0
    %1048 = vmatpush1.xpose.msra.mxu0 0.0
    %1049 = vmatprep.subr.mxu0 0.0
    %1050 = vmatpush1.xpose.msra.mxu0 0.0
    %1051 = vmatprep.subr.mxu0 0.0
    %1052 = vmatpush1.xpose.msra.mxu0 0.0
    %1053 = vmatprep.subr.mxu0 0.0
    %1054 = vmatpush1.xpose.msra.mxu0 0.0
    %1055 = vmatprep.subr.mxu0 0.0
    %1056 = vmatpush1.xpose.msra.mxu0 0.0
    %1057 = vmatprep.subr.mxu0 0.0
    %1058 = vmatpush1.xpose.msra.mxu0 0.0
    %1059 = vmatprep.subr.mxu0 0.0
    %1060 = vmatpush1.xpose.msra.mxu0 0.0
    %1061 = vmatprep.subr.mxu0 0.0
    %1062 = vmatpush1.xpose.msra.mxu0 0.0
    %1063 = vmatprep.subr.mxu0 0.0
    %1064 = vmatpush1.xpose.msra.mxu0 0.0
    %1065 = vmatprep.subr.mxu0 0.0
    %1066 = vmatpush1.xpose.msra.mxu0 0.0
    %1067 = vmatprep.subr.mxu0 0.0
    %1068 = vmatpush1.xpose.msra.mxu0 0.0
    %1069 = vmatprep.subr.mxu0 0.0
    %1070 = vmatpush1.xpose.msra.mxu0 0.0
    %1071 = vmatprep.subr.mxu0 0.0
    %1072 = vmatpush1.xpose.msra.mxu0 0.0
    %1073 = vmatprep.mubr.f32.mxu0 0.0
    %1074 = vmatmul.mubr.f32.gmra.mrb[0].mxu0 %v1005
    %v1075 = vpop.f32.mrb[0].mxu0
    %v1076 = vadd.f32 0.0, %v1075
    %v1077 = vpop.f32.mrb[0].mxu0
    %1078 = vdwg.mxu0
    %v1079 = vsel %vm160, %v1076, -inf
    %1080 = vmax.xlane.f32.xlu0 %v1079
    %v1081 = vpop.xlane.xlu0 %1080
    %v1082 = vsub.f32 %v1076, %v1081
    %v1083 = vmul.f32 %v1082, 1.442695
    %v1084 = vpow.pop %v1083
    %v1085 = vsel %vm160, %v1084, 0.0
    %1086 = vadd.xlane.f32.xlu0 %v1085
    %v1087 = vpop.xlane.xlu0 %1086
    %1088 = vrot.lane.b32.xlu0 %v154, 56
    %v1089 = vpop.permute.xlu0 %1088
    %v1092 = vsel %vm160, %v1084, 0
    %1094 = vmatprep.subr.mxu0 0.0
    %1095 = vmatpush1.msra.mxu0 %v1089
    %1096 = vmatprep.subr.mxu0 0.0
    %1097 = vmatpush1.msra.mxu0 0.0
    %1098 = vmatprep.subr.mxu0 0.0
    %1099 = vmatpush1.msra.mxu0 0.0
    %1100 = vmatprep.subr.mxu0 0.0
    %1101 = vmatpush1.msra.mxu0 0.0
    %1102 = vmatprep.subr.mxu0 0.0
    %1103 = vmatpush1.msra.mxu0 0.0
    %1104 = vmatprep.subr.mxu0 0.0
    %1105 = vmatpush1.msra.mxu0 0.0
    %1106 = vmatprep.subr.mxu0 0.0
    %1107 = vmatpush1.msra.mxu0 0.0
    %1108 = vmatprep.subr.mxu0 0.0
    %1109 = vmatpush1.msra.mxu0 0.0
    %1110 = vmatprep.subr.mxu0 0.0
    %1111 = vmatpush1.msra.mxu0 0.0
    %1112 = vmatprep.subr.mxu0 0.0
    %1113 = vmatpush1.msra.mxu0 0.0
    %1114 = vmatprep.subr.mxu0 0.0
    %1115 = vmatpush1.msra.mxu0 0.0
    %1116 = vmatprep.subr.mxu0 0.0
    %1117 = vmatpush1.msra.mxu0 0.0
    %1118 = vmatprep.subr.mxu0 0.0
    %1119 = vmatpush1.msra.mxu0 0.0
    %1120 = vmatprep.subr.mxu0 0.0
    %1121 = vmatpush1.msra.mxu0 0.0
    %1122 = vmatprep.subr.mxu0 0.0
    %1123 = vmatpush1.msra.mxu0 0.0
    %1124 = vmatprep.subr.mxu0 0.0
    %1125 = vmatpush1.msra.mxu0 0.0
    %1126 = vmatprep.subr.mxu0 0.0
    %1127 = vmatpush1.msra.mxu0 0.0
    %1128 = vmatprep.subr.mxu0 0.0
    %1129 = vmatpush1.msra.mxu0 0.0
    %1130 = vmatprep.subr.mxu0 0.0
    %1131 = vmatpush1.msra.mxu0 0.0
    %1132 = vmatprep.subr.mxu0 0.0
    %1133 = vmatpush1.msra.mxu0 0.0
    %1134 = vmatprep.subr.mxu0 0.0
    %1135 = vmatpush1.msra.mxu0 0.0
    %1136 = vmatprep.subr.mxu0 0.0
    %1137 = vmatpush1.msra.mxu0 0.0
    %1138 = vmatprep.subr.mxu0 0.0
    %1139 = vmatpush1.msra.mxu0 0.0
    %1140 = vmatprep.subr.mxu0 0.0
    %1141 = vmatpush1.msra.mxu0 0.0
    %1142 = vmatprep.subr.mxu0 0.0
    %1143 = vmatpush1.msra.mxu0 0.0
    %1144 = vmatprep.subr.mxu0 0.0
    %1145 = vmatpush1.msra.mxu0 0.0
    %1146 = vmatprep.subr.mxu0 0.0
    %1147 = vmatpush1.msra.mxu0 0.0
    %1148 = vmatprep.subr.mxu0 0.0
    %1149 = vmatpush1.msra.mxu0 0.0
    %1150 = vmatprep.subr.mxu0 0.0
    %1151 = vmatpush1.msra.mxu0 0.0
    %1152 = vmatprep.subr.mxu0 0.0
    %1153 = vmatpush1.msra.mxu0 0.0
    %1154 = vmatprep.subr.mxu0 0.0
    %1155 = vmatpush1.msra.mxu0 0.0
    %1156 = vmatprep.subr.mxu0 0.0
    %1157 = vmatpush1.msra.mxu0 0.0
    %1158 = vmatprep.mubr.f32.mxu0 0.0
    %1159 = vmatmul.mubr.f32.gmra.mrb[0].mxu0 %v1092
    %v1160 = vpop.f32.mrb[0].mxu0
    %v1161 = vadd.f32 0.0, %v1160
    %v1162 = vpop.f32.mrb[0].mxu0
    %1163 = vdwg.mxu0
    %v1164 = vrcp.pop %v1087
    %v1165 = vmul.f32 %v1161, %v1164
    %1167 = vrot.lane.b32.xlu0 %v1165, 8
    %v1168 = vpop.permute.xlu0 %1167
    %1170 = vst.msk [vmem:[#allocation2 + $0x8] sm:$0xff] %vm492, %v1168
    %1171 = vrot.lane.b32.xlu0 %v154, 112
    %v1172 = vpop.permute.xlu0 %1171
    %1173 = vrot.lane.b32.xlu0 %v154, 80
    %v1174 = vpop.permute.xlu0 %1173
    %v1175 = vsel %vm160, %v1172, 0
    %v1177 = vsel %vm160, %v1174, 0
    %1179 = vmatprep.subr.mxu0 0.0
    %1180 = vmatpush1.xpose.msra.mxu0 %v1177
    %1181 = vmatprep.subr.mxu0 0.0
    %1182 = vmatpush1.xpose.msra.mxu0 0.0
    %1183 = vmatprep.subr.mxu0 0.0
    %1184 = vmatpush1.xpose.msra.mxu0 0.0
    %1185 = vmatprep.subr.mxu0 0.0
    %1186 = vmatpush1.xpose.msra.mxu0 0.0
    %1187 = vmatprep.subr.mxu0 0.0
    %1188 = vmatpush1.xpose.msra.mxu0 0.0
    %1189 = vmatprep.subr.mxu0 0.0
    %1190 = vmatpush1.xpose.msra.mxu0 0.0
    %1191 = vmatprep.subr.mxu0 0.0
    %1192 = vmatpush1.xpose.msra.mxu0 0.0
    %1193 = vmatprep.subr.mxu0 0.0
    %1194 = vmatpush1.xpose.msra.mxu0 0.0
    %1195 = vmatprep.subr.mxu0 0.0
    %1196 = vmatpush1.xpose.msra.mxu0 0.0
    %1197 = vmatprep.subr.mxu0 0.0
    %1198 = vmatpush1.xpose.msra.mxu0 0.0
    %1199 = vmatprep.subr.mxu0 0.0
    %1200 = vmatpush1.xpose.msra.mxu0 0.0
    %1201 = vmatprep.subr.mxu0 0.0
    %1202 = vmatpush1.xpose.msra.mxu0 0.0
    %1203 = vmatprep.subr.mxu0 0.0
    %1204 = vmatpush1.xpose.msra.mxu0 0.0
    %1205 = vmatprep.subr.mxu0 0.0
    %1206 = vmatpush1.xpose.msra.mxu0 0.0
    %1207 = vmatprep.subr.mxu0 0.0
    %1208 = vmatpush1.xpose.msra.mxu0 0.0
    %1209 = vmatprep.subr.mxu0 0.0
    %1210 = vmatpush1.xpose.msra.mxu0 0.0
    %1211 = vmatprep.subr.mxu0 0.0
    %1212 = vmatpush1.xpose.msra.mxu0 0.0
    %1213 = vmatprep.subr.mxu0 0.0
    %1214 = vmatpush1.xpose.msra.mxu0 0.0
    %1215 = vmatprep.subr.mxu0 0.0
    %1216 = vmatpush1.xpose.msra.mxu0 0.0
    %1217 = vmatprep.subr.mxu0 0.0
    %1218 = vmatpush1.xpose.msra.mxu0 0.0
    %1219 = vmatprep.subr.mxu0 0.0
    %1220 = vmatpush1.xpose.msra.mxu0 0.0
    %1221 = vmatprep.subr.mxu0 0.0
    %1222 = vmatpush1.xpose.msra.mxu0 0.0
    %1223 = vmatprep.subr.mxu0 0.0
    %1224 = vmatpush1.xpose.msra.mxu0 0.0
    %1225 = vmatprep.subr.mxu0 0.0
    %1226 = vmatpush1.xpose.msra.mxu0 0.0
    %1227 = vmatprep.subr.mxu0 0.0
    %1228 = vmatpush1.xpose.msra.mxu0 0.0
    %1229 = vmatprep.subr.mxu0 0.0
    %1230 = vmatpush1.xpose.msra.mxu0 0.0
    %1231 = vmatprep.subr.mxu0 0.0
    %1232 = vmatpush1.xpose.msra.mxu0 0.0
    %1233 = vmatprep.subr.mxu0 0.0
    %1234 = vmatpush1.xpose.msra.mxu0 0.0
    %1235 = vmatprep.subr.mxu0 0.0
    %1236 = vmatpush1.xpose.msra.mxu0 0.0
    %1237 = vmatprep.subr.mxu0 0.0
    %1238 = vmatpush1.xpose.msra.mxu0 0.0
    %1239 = vmatprep.subr.mxu0 0.0
    %1240 = vmatpush1.xpose.msra.mxu0 0.0
    %1241 = vmatprep.subr.mxu0 0.0
    %1242 = vmatpush1.xpose.msra.mxu0 0.0
    %1243 = vmatprep.mubr.f32.mxu0 0.0
    %1244 = vmatmul.mubr.f32.gmra.mrb[0].mxu0 %v1175
    %v1245 = vpop.f32.mrb[0].mxu0
    %v1246 = vadd.f32 0.0, %v1245
    %v1247 = vpop.f32.mrb[0].mxu0
    %1248 = vdwg.mxu0
    %v1249 = vsel %vm160, %v1246, -inf
    %1250 = vmax.xlane.f32.xlu0 %v1249
    %v1251 = vpop.xlane.xlu0 %1250
    %v1252 = vsub.f32 %v1246, %v1251
    %v1253 = vmul.f32 %v1252, 1.442695
    %v1254 = vpow.pop %v1253
    %v1255 = vsel %vm160, %v1254, 0.0
    %1256 = vadd.xlane.f32.xlu0 %v1255
    %v1257 = vpop.xlane.xlu0 %1256
    %1258 = vrot.lane.b32.xlu0 %v154, 48
    %v1259 = vpop.permute.xlu0 %1258
    %v1262 = vsel %vm160, %v1254, 0
    %1264 = vmatprep.subr.mxu0 0.0
    %1265 = vmatpush1.msra.mxu0 %v1259
    %1266 = vmatprep.subr.mxu0 0.0
    %1267 = vmatpush1.msra.mxu0 0.0
    %1268 = vmatprep.subr.mxu0 0.0
    %1269 = vmatpush1.msra.mxu0 0.0
    %1270 = vmatprep.subr.mxu0 0.0
    %1271 = vmatpush1.msra.mxu0 0.0
    %1272 = vmatprep.subr.mxu0 0.0
    %1273 = vmatpush1.msra.mxu0 0.0
    %1274 = vmatprep.subr.mxu0 0.0
    %1275 = vmatpush1.msra.mxu0 0.0
    %1276 = vmatprep.subr.mxu0 0.0
    %1277 = vmatpush1.msra.mxu0 0.0
    %1278 = vmatprep.subr.mxu0 0.0
    %1279 = vmatpush1.msra.mxu0 0.0
    %1280 = vmatprep.subr.mxu0 0.0
    %1281 = vmatpush1.msra.mxu0 0.0
    %1282 = vmatprep.subr.mxu0 0.0
    %1283 = vmatpush1.msra.mxu0 0.0
    %1284 = vmatprep.subr.mxu0 0.0
    %1285 = vmatpush1.msra.mxu0 0.0
    %1286 = vmatprep.subr.mxu0 0.0
    %1287 = vmatpush1.msra.mxu0 0.0
    %1288 = vmatprep.subr.mxu0 0.0
    %1289 = vmatpush1.msra.mxu0 0.0
    %1290 = vmatprep.subr.mxu0 0.0
    %1291 = vmatpush1.msra.mxu0 0.0
    %1292 = vmatprep.subr.mxu0 0.0
    %1293 = vmatpush1.msra.mxu0 0.0
    %1294 = vmatprep.subr.mxu0 0.0
    %1295 = vmatpush1.msra.mxu0 0.0
    %1296 = vmatprep.subr.mxu0 0.0
    %1297 = vmatpush1.msra.mxu0 0.0
    %1298 = vmatprep.subr.mxu0 0.0
    %1299 = vmatpush1.msra.mxu0 0.0
    %1300 = vmatprep.subr.mxu0 0.0
    %1301 = vmatpush1.msra.mxu0 0.0
    %1302 = vmatprep.subr.mxu0 0.0
    %1303 = vmatpush1.msra.mxu0 0.0
    %1304 = vmatprep.subr.mxu0 0.0
    %1305 = vmatpush1.msra.mxu0 0.0
    %1306 = vmatprep.subr.mxu0 0.0
    %1307 = vmatpush1.msra.mxu0 0.0
    %1308 = vmatprep.subr.mxu0 0.0
    %1309 = vmatpush1.msra.mxu0 0.0
    %1310 = vmatprep.subr.mxu0 0.0
    %1311 = vmatpush1.msra.mxu0 0.0
    %1312 = vmatprep.subr.mxu0 0.0
    %1313 = vmatpush1.msra.mxu0 0.0
    %1314 = vmatprep.subr.mxu0 0.0
    %1315 = vmatpush1.msra.mxu0 0.0
    %1316 = vmatprep.subr.mxu0 0.0
    %1317 = vmatpush1.msra.mxu0 0.0
    %1318 = vmatprep.subr.mxu0 0.0
    %1319 = vmatpush1.msra.mxu0 0.0
    %1320 = vmatprep.subr.mxu0 0.0
    %1321 = vmatpush1.msra.mxu0 0.0
    %1322 = vmatprep.subr.mxu0 0.0
    %1323 = vmatpush1.msra.mxu0 0.0
    %1324 = vmatprep.subr.mxu0 0.0
    %1325 = vmatpush1.msra.mxu0 0.0
    %1326 = vmatprep.subr.mxu0 0.0
    %1327 = vmatpush1.msra.mxu0 0.0
    %1328 = vmatprep.mubr.f32.mxu0 0.0
    %1329 = vmatmul.mubr.f32.gmra.mrb[0].mxu0 %v1262
    %v1330 = vpop.f32.mrb[0].mxu0
    %v1331 = vadd.f32 0.0, %v1330
    %v1332 = vpop.f32.mrb[0].mxu0
    %1333 = vdwg.mxu0
    %v1334 = vrcp.pop %v1257
    %v1335 = vmul.f32 %v1331, %v1334
    %1337 = vrot.lane.b32.xlu0 %v1335, 16
    %v1338 = vpop.permute.xlu0 %1337
    %1340 = vst.msk [vmem:[#allocation2 + $0x8] sm:$0xff] %vm663, %v1338
    %1341 = vrot.lane.b32.xlu0 %v154, 104
    %v1342 = vpop.permute.xlu0 %1341
    %1343 = vrot.lane.b32.xlu0 %v154, 72
    %v1344 = vpop.permute.xlu0 %1343
    %v1345 = vsel %vm160, %v1342, 0
    %v1347 = vsel %vm160, %v1344, 0
    %1349 = vmatprep.subr.mxu0 0.0
    %1350 = vmatpush1.xpose.msra.mxu0 %v1347
    %1351 = vmatprep.subr.mxu0 0.0
    %1352 = vmatpush1.xpose.msra.mxu0 0.0
    %1353 = vmatprep.subr.mxu0 0.0
    %1354 = vmatpush1.xpose.msra.mxu0 0.0
    %1355 = vmatprep.subr.mxu0 0.0
    %1356 = vmatpush1.xpose.msra.mxu0 0.0
    %1357 = vmatprep.subr.mxu0 0.0
    %1358 = vmatpush1.xpose.msra.mxu0 0.0
    %1359 = vmatprep.subr.mxu0 0.0
    %1360 = vmatpush1.xpose.msra.mxu0 0.0
    %1361 = vmatprep.subr.mxu0 0.0
    %1362 = vmatpush1.xpose.msra.mxu0 0.0
    %1363 = vmatprep.subr.mxu0 0.0
    %1364 = vmatpush1.xpose.msra.mxu0 0.0
    %1365 = vmatprep.subr.mxu0 0.0
    %1366 = vmatpush1.xpose.msra.mxu0 0.0
    %1367 = vmatprep.subr.mxu0 0.0
    %1368 = vmatpush1.xpose.msra.mxu0 0.0
    %1369 = vmatprep.subr.mxu0 0.0
    %1370 = vmatpush1.xpose.msra.mxu0 0.0
    %1371 = vmatprep.subr.mxu0 0.0
    %1372 = vmatpush1.xpose.msra.mxu0 0.0
    %1373 = vmatprep.subr.mxu0 0.0
    %1374 = vmatpush1.xpose.msra.mxu0 0.0
    %1375 = vmatprep.subr.mxu0 0.0
    %1376 = vmatpush1.xpose.msra.mxu0 0.0
    %1377 = vmatprep.subr.mxu0 0.0
    %1378 = vmatpush1.xpose.msra.mxu0 0.0
    %1379 = vmatprep.subr.mxu0 0.0
    %1380 = vmatpush1.xpose.msra.mxu0 0.0
    %1381 = vmatprep.subr.mxu0 0.0
    %1382 = vmatpush1.xpose.msra.mxu0 0.0
    %1383 = vmatprep.subr.mxu0 0.0
    %1384 = vmatpush1.xpose.msra.mxu0 0.0
    %1385 = vmatprep.subr.mxu0 0.0
    %1386 = vmatpush1.xpose.msra.mxu0 0.0
    %1387 = vmatprep.subr.mxu0 0.0
    %1388 = vmatpush1.xpose.msra.mxu0 0.0
    %1389 = vmatprep.subr.mxu0 0.0
    %1390 = vmatpush1.xpose.msra.mxu0 0.0
    %1391 = vmatprep.subr.mxu0 0.0
    %1392 = vmatpush1.xpose.msra.mxu0 0.0
    %1393 = vmatprep.subr.mxu0 0.0
    %1394 = vmatpush1.xpose.msra.mxu0 0.0
    %1395 = vmatprep.subr.mxu0 0.0
    %1396 = vmatpush1.xpose.msra.mxu0 0.0
    %1397 = vmatprep.subr.mxu0 0.0
    %1398 = vmatpush1.xpose.msra.mxu0 0.0
    %1399 = vmatprep.subr.mxu0 0.0
    %1400 = vmatpush1.xpose.msra.mxu0 0.0
    %1401 = vmatprep.subr.mxu0 0.0
    %1402 = vmatpush1.xpose.msra.mxu0 0.0
    %1403 = vmatprep.subr.mxu0 0.0
    %1404 = vmatpush1.xpose.msra.mxu0 0.0
    %1405 = vmatprep.subr.mxu0 0.0
    %1406 = vmatpush1.xpose.msra.mxu0 0.0
    %1407 = vmatprep.subr.mxu0 0.0
    %1408 = vmatpush1.xpose.msra.mxu0 0.0
    %1409 = vmatprep.subr.mxu0 0.0
    %1410 = vmatpush1.xpose.msra.mxu0 0.0
    %1411 = vmatprep.subr.mxu0 0.0
    %1412 = vmatpush1.xpose.msra.mxu0 0.0
    %1413 = vmatprep.mubr.f32.mxu0 0.0
    %1414 = vmatmul.mubr.f32.gmra.mrb[0].mxu0 %v1345
    %v1415 = vpop.f32.mrb[0].mxu0
    %v1416 = vadd.f32 0.0, %v1415
    %v1417 = vpop.f32.mrb[0].mxu0
    %1418 = vdwg.mxu0
    %v1419 = vsel %vm160, %v1416, -inf
    %1420 = vmax.xlane.f32.xlu0 %v1419
    %v1421 = vpop.xlane.xlu0 %1420
    %v1422 = vsub.f32 %v1416, %v1421
    %v1423 = vmul.f32 %v1422, 1.442695
    %v1424 = vpow.pop %v1423
    %v1425 = vsel %vm160, %v1424, 0.0
    %1426 = vadd.xlane.f32.xlu0 %v1425
    %v1427 = vpop.xlane.xlu0 %1426
    %1428 = vrot.lane.b32.xlu0 %v154, 40
    %v1429 = vpop.permute.xlu0 %1428
    %v1432 = vsel %vm160, %v1424, 0
    %1434 = vmatprep.subr.mxu0 0.0
    %1435 = vmatpush1.msra.mxu0 %v1429
    %1436 = vmatprep.subr.mxu0 0.0
    %1437 = vmatpush1.msra.mxu0 0.0
    %1438 = vmatprep.subr.mxu0 0.0
    %1439 = vmatpush1.msra.mxu0 0.0
    %1440 = vmatprep.subr.mxu0 0.0
    %1441 = vmatpush1.msra.mxu0 0.0
    %1442 = vmatprep.subr.mxu0 0.0
    %1443 = vmatpush1.msra.mxu0 0.0
    %1444 = vmatprep.subr.mxu0 0.0
    %1445 = vmatpush1.msra.mxu0 0.0
    %1446 = vmatprep.subr.mxu0 0.0
    %1447 = vmatpush1.msra.mxu0 0.0
    %1448 = vmatprep.subr.mxu0 0.0
    %1449 = vmatpush1.msra.mxu0 0.0
    %1450 = vmatprep.subr.mxu0 0.0
    %1451 = vmatpush1.msra.mxu0 0.0
    %1452 = vmatprep.subr.mxu0 0.0
    %1453 = vmatpush1.msra.mxu0 0.0
    %1454 = vmatprep.subr.mxu0 0.0
    %1455 = vmatpush1.msra.mxu0 0.0
    %1456 = vmatprep.subr.mxu0 0.0
    %1457 = vmatpush1.msra.mxu0 0.0
    %1458 = vmatprep.subr.mxu0 0.0
    %1459 = vmatpush1.msra.mxu0 0.0
    %1460 = vmatprep.subr.mxu0 0.0
    %1461 = vmatpush1.msra.mxu0 0.0
    %1462 = vmatprep.subr.mxu0 0.0
    %1463 = vmatpush1.msra.mxu0 0.0
    %1464 = vmatprep.subr.mxu0 0.0
    %1465 = vmatpush1.msra.mxu0 0.0
    %1466 = vmatprep.subr.mxu0 0.0
    %1467 = vmatpush1.msra.mxu0 0.0
    %1468 = vmatprep.subr.mxu0 0.0
    %1469 = vmatpush1.msra.mxu0 0.0
    %1470 = vmatprep.subr.mxu0 0.0
    %1471 = vmatpush1.msra.mxu0 0.0
    %1472 = vmatprep.subr.mxu0 0.0
    %1473 = vmatpush1.msra.mxu0 0.0
    %1474 = vmatprep.subr.mxu0 0.0
    %1475 = vmatpush1.msra.mxu0 0.0
    %1476 = vmatprep.subr.mxu0 0.0
    %1477 = vmatpush1.msra.mxu0 0.0
    %1478 = vmatprep.subr.mxu0 0.0
    %1479 = vmatpush1.msra.mxu0 0.0
    %1480 = vmatprep.subr.mxu0 0.0
    %1481 = vmatpush1.msra.mxu0 0.0
    %1482 = vmatprep.subr.mxu0 0.0
    %1483 = vmatpush1.msra.mxu0 0.0
    %1484 = vmatprep.subr.mxu0 0.0
    %1485 = vmatpush1.msra.mxu0 0.0
    %1486 = vmatprep.subr.mxu0 0.0
    %1487 = vmatpush1.msra.mxu0 0.0
    %1488 = vmatprep.subr.mxu0 0.0
    %1489 = vmatpush1.msra.mxu0 0.0
    %1490 = vmatprep.subr.mxu0 0.0
    %1491 = vmatpush1.msra.mxu0 0.0
    %1492 = vmatprep.subr.mxu0 0.0
    %1493 = vmatpush1.msra.mxu0 0.0
    %1494 = vmatprep.subr.mxu0 0.0
    %1495 = vmatpush1.msra.mxu0 0.0
    %1496 = vmatprep.subr.mxu0 0.0
    %1497 = vmatpush1.msra.mxu0 0.0
    %1498 = vmatprep.mubr.f32.mxu0 0.0
    %1499 = vmatmul.mubr.f32.gmra.mrb[0].mxu0 %v1432
    %v1500 = vpop.f32.mrb[0].mxu0
    %v1501 = vadd.f32 0.0, %v1500
    %v1502 = vpop.f32.mrb[0].mxu0
    %1503 = vdwg.mxu0
    %v1504 = vrcp.pop %v1427
    %v1505 = vmul.f32 %v1501, %v1504
    %1507 = vrot.lane.b32.xlu0 %v1505, 24
    %v1508 = vpop.permute.xlu0 %1507
    %1510 = vst.msk [vmem:[#allocation2 + $0x8] sm:$0xff] %vm834, %v1508
    %v1511 = vld [vmem:[#allocation2] sm:$0xff]
    %v1512 = vld [vmem:[#allocation2 + $0x8] sm:$0xff]
    %v1513 = vld [vmem:[#allocation8] sm:$0xff]
    %v1514 = vld [vmem:[#allocation8 + $0x8] sm:$0xff]
    %v1515 = vld [vmem:[#allocation8 + $0x10] sm:$0xff]
    %v1516 = vld [vmem:[#allocation8 + $0x18] sm:$0xff]
    %v1517 = vld [vmem:[%s4] sm:$0x1]
    %v1519 = vlaneseq
    %v1520 = vshrl.u32 %v1519, 7
    %v1521 = vsub.s32 0, %v1520
    %v1522 = vrot.slane %v1517, %v1521
    %v1525 = vsel %vm75, %v1511, 0
    %v1528 = vsel %vm75, %v1512, 0
    %1530 = vmatprep.subr.mxu0 0.0
    %1531 = vmatpush1.msra.mxu0 %v1513
    %1532 = vmatprep.subr.mxu0 0.0
    %1533 = vmatpush1.msra.mxu0 %v1514
    %1534 = vmatprep.subr.mxu0 0.0
    %1535 = vmatpush1.msra.mxu0 %v1515
    %1536 = vmatprep.subr.mxu0 0.0
    %1537 = vmatpush1.msra.mxu0 %v1516
    %1538 = vmatprep.subr.mxu0 0.0
    %1539 = vmatpush1.msra.mxu0 0.0
    %1540 = vmatprep.subr.mxu0 0.0
    %1541 = vmatpush1.msra.mxu0 0.0
    %1542 = vmatprep.subr.mxu0 0.0
    %1543 = vmatpush1.msra.mxu0 0.0
    %1544 = vmatprep.subr.mxu0 0.0
    %1545 = vmatpush1.msra.mxu0 0.0
    %1546 = vmatprep.subr.mxu0 0.0
    %1547 = vmatpush1.msra.mxu0 0.0
    %1548 = vmatprep.subr.mxu0 0.0
    %1549 = vmatpush1.msra.mxu0 0.0
    %1550 = vmatprep.subr.mxu0 0.0
    %1551 = vmatpush1.msra.mxu0 0.0
    %1552 = vmatprep.subr.mxu0 0.0
    %1553 = vmatpush1.msra.mxu0 0.0
    %1554 = vmatprep.subr.mxu0 0.0
    %1555 = vmatpush1.msra.mxu0 0.0
    %1556 = vmatprep.subr.mxu0 0.0
    %1557 = vmatpush1.msra.mxu0 0.0
    %1558 = vmatprep.subr.mxu0 0.0
    %1559 = vmatpush1.msra.mxu0 0.0
    %1560 = vmatprep.subr.mxu0 0.0
    %1561 = vmatpush1.msra.mxu0 0.0
    %1562 = vmatprep.subr.mxu0 0.0
    %1563 = vmatpush1.msra.mxu0 0.0
    %1564 = vmatprep.subr.mxu0 0.0
    %1565 = vmatpush1.msra.mxu0 0.0
    %1566 = vmatprep.subr.mxu0 0.0
    %1567 = vmatpush1.msra.mxu0 0.0
    %1568 = vmatprep.subr.mxu0 0.0
    %1569 = vmatpush1.msra.mxu0 0.0
    %1570 = vmatprep.subr.mxu0 0.0
    %1571 = vmatpush1.msra.mxu0 0.0
    %1572 = vmatprep.subr.mxu0 0.0
    %1573 = vmatpush1.msra.mxu0 0.0
    %1574 = vmatprep.subr.mxu0 0.0
    %1575 = vmatpush1.msra.mxu0 0.0
    %1576 = vmatprep.subr.mxu0 0.0
    %1577 = vmatpush1.msra.mxu0 0.0
    %1578 = vmatprep.subr.mxu0 0.0
    %1579 = vmatpush1.msra.mxu0 0.0
    %1580 = vmatprep.subr.mxu0 0.0
    %1581 = vmatpush1.msra.mxu0 0.0
    %1582 = vmatprep.subr.mxu0 0.0
    %1583 = vmatpush1.msra.mxu0 0.0
    %1584 = vmatprep.subr.mxu0 0.0
    %1585 = vmatpush1.msra.mxu0 0.0
    %1586 = vmatprep.subr.mxu0 0.0
    %1587 = vmatpush1.msra.mxu0 0.0
    %1588 = vmatprep.subr.mxu0 0.0
    %1589 = vmatpush1.msra.mxu0 0.0
    %1590 = vmatprep.subr.mxu0 0.0
    %1591 = vmatpush1.msra.mxu0 0.0
    %1592 = vmatprep.subr.mxu0 0.0
    %1593 = vmatpush1.msra.mxu0 0.0
    %1594 = vmatprep.mubr.f32.mxu0 0.0
    %1595 = vmatmul.mubr.f32.gmra.mrb[0].mxu0 %v1525
    %v1596 = vpop.f32.mrb[0].mxu0
    %v1597 = vadd.f32 %v1522, %v1596
    %v1598 = vpop.f32.mrb[0].mxu0
    %1599 = vmatprep.mubr.f32.mxu0 0.0
    %1600 = vmatmul.mubr.f32.gmra.mrb[0].mxu0 %v1528
    %v1601 = vpop.f32.mrb[0].mxu0
    %v1602 = vadd.f32 %v1522, %v1601
    %v1603 = vpop.f32.mrb[0].mxu0
    %1604 = vdwg.mxu0
    %1605 = vst.msk [vmem:[#allocation9] sm:$0xff] %vm75, %v1597
    %1606 = vst.msk [vmem:[#allocation9 + $0x8] sm:$0xff] %vm75, %v1602
    // Predicated region
    $region34: #{tpu_custom_call.1} parent=1 // pred_check
      _
    $region35: #{tpu_custom_call.1} parent=1 // pred_check_branch
      %1608 = sbr.rel (0) target = $region37
    $region36: #{tpu_custom_call.1} parent=1 // pred_region
      %s1610 = ssub.s32 256, 256
      %1611 = vsyncadd [#allocation5], %s1610
      %s1612 = sshll.u32 [#allocation9], 4
      %s1613 = int_to_ptr.vmem [resolvable:$true] %s1612
      %1618 = dma.vmem_to_hbm [thread:$0]  %s1613, 256, %s5, [#allocation5], 128, 128, 8
    $region37: #{tpu_custom_call.1} parent=1 // pred_fallthru
      _
    // Predicated region
    $region38: #{tpu_custom_call.1} parent=1 // pred_check
      _
    $region39: #{tpu_custom_call.1} parent=1 // pred_check_branch
      %1620 = sbr.rel (0) target = $region41
    $region40: #{tpu_custom_call.1} parent=1 // pred_region
      %1621 = dma.done [#allocation5], 256
    $region41: #{tpu_custom_call.1} parent=1 // pred_fallthru
      _
    %1622 = vsyncpa [#allocation4], 1
    %1623 = vsyncpa [#allocation7], 1
    %1624 = vsyncpa [#allocation5], 1

</llo_original>
